<compile_context>
chip_gen: v6e
topology: v6e:2x2x1
jax: 0.10.0
libtpu: 0.0.40
codegen_flags: <defaults>
</compile_context>

<pallas_src>
import jax
import jax.numpy as jnp
from jax.experimental import pallas as pl
from jax.experimental.pallas import tpu as pltpu


def _ncr_forward_kernel(gu_ref, gi_ref, o_ref):
    # gu_ref / gi_ref: (tb, D) blocks straight from HBM (batch on sublanes,
    # embedding on lanes).  f32 multiply (bf16-safe), cross-lane reduce,
    # (tb, 1) f32 store.  Kernel is purely HBM-read bound.
    prod = gu_ref[...].astype(jnp.float32) * gi_ref[...].astype(jnp.float32)
    o_ref[...] = jnp.sum(prod, axis=-1, keepdims=True)


def _pick_batch_tile(B, D, itemsize, *, tile_bytes_per_operand, max_tile_rows):
    """Rows per grid step.

    Big enough to amortize the fixed per-step pipeline overhead (~0.35 us),
    small enough that 2 operands x 2 pipeline buffers stay well inside the
    v5e 16 MiB scoped-VMEM default.  No divisibility requirement on B: the
    batch is padded up to a multiple of the chosen tile.
    """
    SUB = 8  # f32 sublane granularity for the second-to-last block dim
    b_pad8 = -(-B // SUB) * SUB
    tb = tile_bytes_per_operand // max(D * itemsize, 1)
    tb = int(min(tb, max_tile_rows, b_pad8))
    tb = max(SUB, (tb // SUB) * SUB)
    # Keep >= 2 grid steps for reasonably large batches so
    # dimension_semantics=("parallel",) can shard across both v7x TensorCores.
    if tb >= b_pad8 and b_pad8 >= 2048:
        tb = -(-(b_pad8 // 2) // SUB) * SUB
    bp = -(-B // tb) * tb
    return tb, bp


def ncr_forward(gu, gi, *, min_kernel_elems=65536,
                tile_bytes_per_operand=2 << 20, max_tile_rows=32768):
    """NCRModel.forward: xui = sum(squeeze(gu) * squeeze(gi), -1).

    Takes the pre-gathered user / item embedding rows (the module's forward
    contract) and returns float32 scores.
    """
    gamma_u = jnp.squeeze(gu)  # torch.squeeze semantics: drop all size-1 dims
    gamma_i = jnp.squeeze(gi)

    # Degenerate squeezes (B==1 or D==1): nothing for a kernel to do.
    if gamma_u.ndim != 2:
        return jnp.sum(gamma_u.astype(jnp.float32) * gamma_i.astype(jnp.float32), axis=-1)

    B, D = gamma_u.shape
    assert gamma_i.shape == (B, D), (gamma_i.shape, (B, D))

    # Small problems: XLA's fused multiply-reduce is already at the HBM
    # roofline; skip the pallas_call launch cost.
    if B * D < min_kernel_elems:
        return jnp.sum(gamma_u.astype(jnp.float32) * gamma_i.astype(jnp.float32), axis=-1)

    itemsize = jnp.dtype(gamma_u.dtype).itemsize
    tb, Bp = _pick_batch_tile(
        B, D, itemsize,
        tile_bytes_per_operand=tile_bytes_per_operand,
        max_tile_rows=max_tile_rows)

    pad = Bp - B
    if pad:
        # Zero padding is additive-identity safe; padded tail sliced off below.
        gamma_u = jnp.pad(gamma_u, ((0, pad), (0, 0)))
        gamma_i = jnp.pad(gamma_i, ((0, pad), (0, 0)))

    out = pl.pallas_call(
        _ncr_forward_kernel,
        out_shape=jax.ShapeDtypeStruct((Bp, 1), jnp.float32),
        grid_spec=pl.GridSpec(
            grid=(Bp // tb,),
            in_specs=[
                pl.BlockSpec((tb, D), lambda i: (i, 0)),
                pl.BlockSpec((tb, D), lambda i: (i, 0)),
            ],
            out_specs=pl.BlockSpec((tb, 1), lambda i: (i, 0)),
        ),
        compiler_params=pltpu.CompilerParams(
            dimension_semantics=("parallel",),
        ),
        cost_estimate=pl.CostEstimate(
            flops=2 * B * D,
            transcendentals=0,
            bytes_accessed=2 * B * D * itemsize + B * 4,
        ),
    )(gamma_u, gamma_i)
    return out[:B, 0]


def xavier_normal(key, shape, dtype=jnp.float32):
    # torch.nn.init.xavier_normal_: std = sqrt(2 / (fan_in + fan_out))
    fan_in, fan_out = shape
    std = (2.0 / (fan_in + fan_out)) ** 0.5
    return std * jax.random.normal(key, shape, dtype=dtype)


if __name__ == "__main__":
    # Shapes implied by __init__: Gu [num_users, embedding_size],
    # Gi [num_items, embedding_size]; forward consumes gathered rows.
    num_users, num_items, embedding_size = 2000, 1500, 32

    key = jax.random.PRNGKey(0)
    k_gu, k_gi = jax.random.split(key)
    Gu = xavier_normal(k_gu, (num_users, embedding_size))
    Gi = xavier_normal(k_gi, (num_items, embedding_size))

    def check(batch, **kwargs):
        ku, kp = jax.random.split(jax.random.fold_in(key, batch))
        user_idx = jax.random.randint(ku, (batch,), 0, num_users)
        pos_idx = jax.random.randint(kp, (batch,), 0, num_items)
        gu = Gu[user_idx]   # [batch, embedding_size]
        gi = Gi[pos_idx]    # [batch, embedding_size]
        xui = jax.block_until_ready(ncr_forward(gu, gi, **kwargs))
        ref = jnp.sum(jnp.squeeze(gu) * jnp.squeeze(gi), axis=-1)
        assert xui.shape == (batch,), xui.shape
        assert xui.dtype == jnp.float32, xui.dtype
        assert jnp.allclose(xui, ref, atol=1e-5, rtol=1e-5)

    # Pallas path: batch divisible by the tile, 2 grid steps (megacore sharding).
    check(batch=4096, min_kernel_elems=0)
    # Pallas path: awkward batch size -> pad-to-tile, single step.
    check(batch=1037, min_kernel_elems=0)
    # Pallas path: forced small tile -> multi-step pipelined grid.
    check(batch=4096, min_kernel_elems=0, max_tile_rows=512)
    # XLA-fused fallback for tiny batches.
    check(batch=8)

    print("KERNEL_OK")
</pallas_src>

<mosaic_0001>
module attributes {stable_mosaic.version = 11 : i64} {
  func.func @_ncr_forward_kernel(%arg0: i32, %arg1: memref<2048x32xf32, #tpu.memory_space<vmem>>, %arg2: memref<2048x32xf32, #tpu.memory_space<vmem>>, %arg3: memref<2048x1xf32, #tpu.memory_space<vmem>>) attributes {dimension_semantics = [#tpu.dimension_semantics<parallel>], iteration_bounds = array<i64: 2>, scalar_prefetch = 0 : i64, scratch_operands = 0 : i64, tpu.core_type = #tpu.core_type<tc>, window_params = [{transform_indices = @transform_0, window_bounds = array<i64: 2048, 32>}, {transform_indices = @transform_1, window_bounds = array<i64: 2048, 32>}, {transform_indices = @transform_2, window_bounds = array<i64: 2048, 1>}]} {
    %c0 = arith.constant 0 : index
    %c0_0 = arith.constant 0 : index
    %0 = vector.load %arg1[%c0, %c0_0] : memref<2048x32xf32, #tpu.memory_space<vmem>>, vector<2048x32xf32>
    %c0_1 = arith.constant 0 : index
    %c0_2 = arith.constant 0 : index
    %1 = vector.load %arg2[%c0_1, %c0_2] : memref<2048x32xf32, #tpu.memory_space<vmem>>, vector<2048x32xf32>
    %2 = arith.mulf %0, %1 : vector<2048x32xf32>
    %cst = arith.constant dense<0.000000e+00> : vector<2048xf32>
    %3 = vector.multi_reduction <add>, %2, %cst [1] : vector<2048x32xf32> to vector<2048xf32>
    %4 = vector.shape_cast %3 : vector<2048xf32> to vector<2048x1xf32>
    %c0_3 = arith.constant 0 : index
    %c0_4 = arith.constant 0 : index
    %5 = vector.load %arg3[%c0_3, %c0_4] : memref<2048x1xf32, #tpu.memory_space<vmem>>, vector<2048x1xf32>
    tpu.vector_store %arg3[%c0_3, %c0_4], %4 {strides = array<i32>} : memref<2048x1xf32, #tpu.memory_space<vmem>>, vector<2048x1xf32>,
    return
  }
  func.func @transform_0(%arg0: i32) -> (i32, i32) {
    %c0_i32 = arith.constant 0 : i32
    %c0_i32_0 = arith.constant 0 : i32
    return %arg0, %c0_i32 : i32, i32
  }
  func.func @transform_1(%arg0: i32) -> (i32, i32) {
    %c0_i32 = arith.constant 0 : i32
    %c0_i32_0 = arith.constant 0 : i32
    return %arg0, %c0_i32 : i32, i32
  }
  func.func @transform_2(%arg0: i32) -> (i32, i32) {
    %c0_i32 = arith.constant 0 : i32
    %c0_i32_0 = arith.constant 0 : i32
    return %arg0, %c0_i32 : i32, i32
  }
}

</mosaic_0001>

<llo_original>
// kernel: tpu_custom_call.1
$region0: #{tpu_custom_call.1}
  #allocation0 [shape = 'u32[]', space=smem, size = 0x4, offset = 0x4, fixed_abs, tag = 'smem constant byte address 0x4 - core index']
  #allocation1 [shape = 'u32[144,128]{1,0:T(1,128)}', space=vmem, size = 0x12000, scoped, tag = 'internal scratch']
  %s0 = inlined_call_operand.vmem [shape: f32[4096,32], index: 0, kind: input, shape index: {}]
  %s1 = inlined_call_operand.vmem [shape: f32[4096,32], index: 1, kind: input, shape index: {}]
  %s2 = inlined_call_operand.vmem [shape: f32[4096,1], index: 2, kind: output, shape index: {}]
  %s3 = sld [smem:[#allocation0]]
  $region41: #{tpu_custom_call.1} parent=0
    _
  %s5 = ssub.s32 1, %s3
  %s6 = scalar_select 0, %s5, %s3
  loop: start=0, step=1, limit=4
  $region2: #{tpu_custom_call.1} parent=0 // loop_pre_header
    _
  $region3: #{tpu_custom_call.1} parent=0 // loop_header
    %s8 = sphi 0, %s12
    %p9 = scmp.ge.s32.totalorder %s8, 4
    %s18 = sphi 0, %s20
    %s21 = sphi 0, %s18
    %s22 = sphi 0, %s21
    %s38 = sphi 0, %s22
    %s44 = sphi 0, %s46
    %s47 = sphi 0, %s44
    %s48 = sphi 0, %s47
    %s64 = sphi 0, %s48
    %s70 = sphi 0, %s72
    %s73 = sphi 0, %s70
    %s74 = sphi 0, %s73
    %s90 = sphi 0, %s74
  $region4: #{tpu_custom_call.1} parent=0 // loop_header_branch
    %11 = sbr.rel (%p9) target = $region8
  $region5: #{tpu_custom_call.1} parent=0 // loop_body
    %s13 = ssub.s32 %s8, 1
    %s14 = ssub.s32 %s8, 2
    %s15 = sadd.s32 %s8, 1
    %s16 = ssub.s32 %s8, %s15
    %p17 = scmp.eq.s32.totalorder %s16, 0
    %s19 = sadd.s32 %s18, 1
    %s20 = scalar_select %p17, %s18, %s19
    %p23 = pneg %p17
    %p24 = scmp.eq.s32.totalorder %s8, 1
    %p25 = por %p23, %p24
    %p26 = scmp.ne.s32.totalorder %s18, %s21
    %p27 = scmp.eq.s32.totalorder %s8, 0
    %p28 = por %p26, %p27
    %p29 = scmp.ne.s32.totalorder %s18, %s21
    %p30 = scmp.eq.s32.totalorder %s13, 1
    %p31 = por %p29, %p30
    %p32 = scmp.ne.s32.totalorder %s21, %s22
    %p33 = scmp.eq.s32.totalorder %s13, 0
    %p34 = por %p32, %p33
    %p35 = scmp.ne.s32.totalorder %s21, %s22
    %p36 = scmp.eq.s32.totalorder %s14, 1
    %p37 = por %p35, %p36
    %p39 = scmp.ne.s32.totalorder %s22, %s38
    %p40 = scmp.eq.s32.totalorder %s14, 0
    %p41 = por %p39, %p40
    %s42 = ssub.s32 %s8, %s15
    %p43 = scmp.eq.s32.totalorder %s42, 0
    %s45 = sadd.s32 %s44, 1
    %s46 = scalar_select %p43, %s44, %s45
    %p49 = pneg %p43
    %p50 = scmp.eq.s32.totalorder %s8, 1
    %p51 = por %p49, %p50
    %p52 = scmp.ne.s32.totalorder %s44, %s47
    %p53 = scmp.eq.s32.totalorder %s8, 0
    %p54 = por %p52, %p53
    %p55 = scmp.ne.s32.totalorder %s44, %s47
    %p56 = scmp.eq.s32.totalorder %s13, 1
    %p57 = por %p55, %p56
    %p58 = scmp.ne.s32.totalorder %s47, %s48
    %p59 = scmp.eq.s32.totalorder %s13, 0
    %p60 = por %p58, %p59
    %p61 = scmp.ne.s32.totalorder %s47, %s48
    %p62 = scmp.eq.s32.totalorder %s14, 1
    %p63 = por %p61, %p62
    %p65 = scmp.ne.s32.totalorder %s48, %s64
    %p66 = scmp.eq.s32.totalorder %s14, 0
    %p67 = por %p65, %p66
    %s68 = ssub.s32 %s8, %s15
    %p69 = scmp.eq.s32.totalorder %s68, 0
    %s71 = sadd.s32 %s70, 1
    %s72 = scalar_select %p69, %s70, %s71
    %p75 = pneg %p69
    %p76 = scmp.eq.s32.totalorder %s8, 1
    %p77 = por %p75, %p76
    %p78 = scmp.ne.s32.totalorder %s70, %s73
    %p79 = scmp.eq.s32.totalorder %s8, 0
    %p80 = por %p78, %p79
    %p81 = scmp.ne.s32.totalorder %s70, %s73
    %p82 = scmp.eq.s32.totalorder %s13, 1
    %p83 = por %p81, %p82
    %p84 = scmp.ne.s32.totalorder %s73, %s74
    %p85 = scmp.eq.s32.totalorder %s13, 0
    %p86 = por %p84, %p85
    %p87 = scmp.ne.s32.totalorder %s73, %s74
    %p88 = scmp.eq.s32.totalorder %s14, 1
    %p89 = por %p87, %p88
    %p91 = scmp.ne.s32.totalorder %s74, %s90
    %p92 = scmp.eq.s32.totalorder %s14, 0
    %p93 = por %p91, %p92
    %p94 = scmp.le.s32.totalorder 1, %s8
    %p95 = scmp.lt.s32.totalorder %s8, 3
    %p96 = pnand %p94, %p95
    %p97 = pneg %p96
    // Predicated region
    $region9: #{tpu_custom_call.1} parent=5 // pred_check
      _
    $region10: #{tpu_custom_call.1} parent=5 // pred_check_branch
      %99 = sbr.rel (%p96) target = $region12
    $region11: #{tpu_custom_call.1} parent=5 // pred_region
      %s100 = ssub.s32 %s8, 1
    $region12: #{tpu_custom_call.1} parent=5 // pred_fallthru
      _
    %p101 = scmp.lt.s32.totalorder %s8, 2
    // Predicated region
    $region13: #{tpu_custom_call.1} parent=5 // pred_check
      %p102 = pneg %p101
    $region14: #{tpu_custom_call.1} parent=5 // pred_check_branch
      %104 = sbr.rel (%p102) target = $region16
    $region15: #{tpu_custom_call.1} parent=5 // pred_region
      // Predicated region
      $region17: #{tpu_custom_call.1} parent=15 // pred_check
        %p105 = pneg %p28
      $region18: #{tpu_custom_call.1} parent=15 // pred_check_branch
        %107 = sbr.rel (%p105) target = $region20
      $region19: #{tpu_custom_call.1} parent=15 // pred_region
        %s108 = smul.u32 256, %s8
        %p109 = scmp.lt.s32.totalorder %s108, 511
        %s110 = scalar_select %p109, %s108, 511
        %s111 = smul.addr %s110, 8
        %s112 = scalar_lea.vmem %s0, %s111
        %s113 = smul.u32 256, %s8
      $region20: #{tpu_custom_call.1} parent=15 // pred_fallthru
        _
      // Predicated region
      $region21: #{tpu_custom_call.1} parent=15 // pred_check
        %p114 = pneg %p54
      $region22: #{tpu_custom_call.1} parent=15 // pred_check_branch
        %116 = sbr.rel (%p114) target = $region24
      $region23: #{tpu_custom_call.1} parent=15 // pred_region
        %s117 = smul.u32 256, %s8
        %p118 = scmp.lt.s32.totalorder %s117, 511
        %s119 = scalar_select %p118, %s117, 511
        %s120 = smul.addr %s119, 8
        %s121 = scalar_lea.vmem %s1, %s120
        %s122 = smul.u32 256, %s8
      $region24: #{tpu_custom_call.1} parent=15 // pred_fallthru
        _
    $region16: #{tpu_custom_call.1} parent=5 // pred_fallthru
      _
    %p123 = scmp.le.s32.totalorder 1, %s8
    %p124 = scmp.lt.s32.totalorder %s8, 3
    %p125 = pnand %p123, %p124
    %p126 = pneg %p125
    // Predicated region
    $region25: #{tpu_custom_call.1} parent=5 // pred_check
      _
    $region26: #{tpu_custom_call.1} parent=5 // pred_check_branch
      %128 = sbr.rel (%p125) target = $region28
    $region27: #{tpu_custom_call.1} parent=5 // pred_region
      %s129 = ssub.s32 %s8, 1
      %s130 = smul.u32 256, %s13
      %p131 = scmp.lt.s32.totalorder %s130, 511
      %s132 = scalar_select %p131, %s130, 511
      %s133 = smul.addr %s132, 8
      %s134 = scalar_lea.vmem %s0, %s133
      %p135 = pneg %p34
      %p136 = pneg %p31
      %s137 = smul.u32 256, %s13
      %p138 = scmp.lt.s32.totalorder %s137, 511
      %s139 = scalar_select %p138, %s137, 511
      %s140 = smul.addr %s139, 8
      %s141 = scalar_lea.vmem %s1, %s140
      %p142 = pneg %p60
      %p143 = pneg %p57
      %p144 = pneg %p86
      %p145 = pneg %p83
      %s146 = smul.u32 256, %s13
      %p147 = scmp.lt.s32.totalorder %s146, 511
      %s148 = scalar_select %p147, %s146, 511
      %s149 = smul.addr %s148, 8
      %s150 = scalar_lea.vmem %s2, %s149
      %s151 = smul.u32 256, %s13
      %p152 = scmp.lt.s32.totalorder %s151, 511
      %s153 = scalar_select %p152, %s151, 511
      %s154 = smul.addr %s153, 8
      %s155 = scalar_lea.vmem %s0, %s154
      %s156 = smul.u32 256, %s13
      %s157 = smul.u32 256, %s13
      %p158 = scmp.lt.s32.totalorder %s157, 511
      %s159 = scalar_select %p158, %s157, 511
      %s160 = smul.addr %s159, 8
      %s161 = scalar_lea.vmem %s1, %s160
      %s162 = smul.u32 256, %s13
      %s163 = smul.u32 256, %s13
      %p164 = scmp.lt.s32.totalorder %s163, 511
      %s165 = scalar_select %p164, %s163, 511
      %s166 = smul.addr %s165, 8
      %s167 = scalar_lea.vmem %s2, %s166
      %s168 = smul.u32 256, %s13
      %v169 = vld [vmem:[%s155] sm:$0xff]
      %v170 = vld [vmem:[%s155 + $0x8] sm:$0xff]
      %v171 = vld [vmem:[%s155 + $0x10] sm:$0xff]
      %v172 = vld [vmem:[%s155 + $0x18] sm:$0xff]
      %v173 = vld [vmem:[%s155 + $0x20] sm:$0xff]
      %v174 = vld [vmem:[%s155 + $0x28] sm:$0xff]
      %v175 = vld [vmem:[%s155 + $0x30] sm:$0xff]
      %v176 = vld [vmem:[%s155 + $0x38] sm:$0xff]
      %v177 = vld [vmem:[%s155 + $0x40] sm:$0xff]
      %v178 = vld [vmem:[%s155 + $0x48] sm:$0xff]
      %v179 = vld [vmem:[%s155 + $0x50] sm:$0xff]
      %v180 = vld [vmem:[%s155 + $0x58] sm:$0xff]
      %v181 = vld [vmem:[%s155 + $0x60] sm:$0xff]
      %v182 = vld [vmem:[%s155 + $0x68] sm:$0xff]
      %v183 = vld [vmem:[%s155 + $0x70] sm:$0xff]
      %v184 = vld [vmem:[%s155 + $0x78] sm:$0xff]
      %v185 = vld [vmem:[%s155 + $0x80] sm:$0xff]
      %v186 = vld [vmem:[%s155 + $0x88] sm:$0xff]
      %v187 = vld [vmem:[%s155 + $0x90] sm:$0xff]
      %v188 = vld [vmem:[%s155 + $0x98] sm:$0xff]
      %v189 = vld [vmem:[%s155 + $0xa0] sm:$0xff]
      %v190 = vld [vmem:[%s155 + $0xa8] sm:$0xff]
      %v191 = vld [vmem:[%s155 + $0xb0] sm:$0xff]
      %v192 = vld [vmem:[%s155 + $0xb8] sm:$0xff]
      %v193 = vld [vmem:[%s155 + $0xc0] sm:$0xff]
      %v194 = vld [vmem:[%s155 + $0xc8] sm:$0xff]
      %v195 = vld [vmem:[%s155 + $0xd0] sm:$0xff]
      %v196 = vld [vmem:[%s155 + $0xd8] sm:$0xff]
      %v197 = vld [vmem:[%s155 + $0xe0] sm:$0xff]
      %v198 = vld [vmem:[%s155 + $0xe8] sm:$0xff]
      %v199 = vld [vmem:[%s155 + $0xf0] sm:$0xff]
      %v200 = vld [vmem:[%s155 + $0xf8] sm:$0xff]
      %v201 = vld [vmem:[%s155 + $0x100] sm:$0xff]
      %v202 = vld [vmem:[%s155 + $0x108] sm:$0xff]
      %v203 = vld [vmem:[%s155 + $0x110] sm:$0xff]
      %v204 = vld [vmem:[%s155 + $0x118] sm:$0xff]
      %v205 = vld [vmem:[%s155 + $0x120] sm:$0xff]
      %v206 = vld [vmem:[%s155 + $0x128] sm:$0xff]
      %v207 = vld [vmem:[%s155 + $0x130] sm:$0xff]
      %v208 = vld [vmem:[%s155 + $0x138] sm:$0xff]
      %v209 = vld [vmem:[%s155 + $0x140] sm:$0xff]
      %v210 = vld [vmem:[%s155 + $0x148] sm:$0xff]
      %v211 = vld [vmem:[%s155 + $0x150] sm:$0xff]
      %v212 = vld [vmem:[%s155 + $0x158] sm:$0xff]
      %v213 = vld [vmem:[%s155 + $0x160] sm:$0xff]
      %v214 = vld [vmem:[%s155 + $0x168] sm:$0xff]
      %v215 = vld [vmem:[%s155 + $0x170] sm:$0xff]
      %v216 = vld [vmem:[%s155 + $0x178] sm:$0xff]
      %v217 = vld [vmem:[%s155 + $0x180] sm:$0xff]
      %v218 = vld [vmem:[%s155 + $0x188] sm:$0xff]
      %v219 = vld [vmem:[%s155 + $0x190] sm:$0xff]
      %v220 = vld [vmem:[%s155 + $0x198] sm:$0xff]
      %v221 = vld [vmem:[%s155 + $0x1a0] sm:$0xff]
      %v222 = vld [vmem:[%s155 + $0x1a8] sm:$0xff]
      %v223 = vld [vmem:[%s155 + $0x1b0] sm:$0xff]
      %v224 = vld [vmem:[%s155 + $0x1b8] sm:$0xff]
      %v225 = vld [vmem:[%s155 + $0x1c0] sm:$0xff]
      %v226 = vld [vmem:[%s155 + $0x1c8] sm:$0xff]
      %v227 = vld [vmem:[%s155 + $0x1d0] sm:$0xff]
      %v228 = vld [vmem:[%s155 + $0x1d8] sm:$0xff]
      %v229 = vld [vmem:[%s155 + $0x1e0] sm:$0xff]
      %v230 = vld [vmem:[%s155 + $0x1e8] sm:$0xff]
      %v231 = vld [vmem:[%s155 + $0x1f0] sm:$0xff]
      %v232 = vld [vmem:[%s155 + $0x1f8] sm:$0xff]
      %v233 = vld [vmem:[%s155 + $0x200] sm:$0xff]
      %v234 = vld [vmem:[%s155 + $0x208] sm:$0xff]
      %v235 = vld [vmem:[%s155 + $0x210] sm:$0xff]
      %v236 = vld [vmem:[%s155 + $0x218] sm:$0xff]
      %v237 = vld [vmem:[%s155 + $0x220] sm:$0xff]
      %v238 = vld [vmem:[%s155 + $0x228] sm:$0xff]
      %v239 = vld [vmem:[%s155 + $0x230] sm:$0xff]
      %v240 = vld [vmem:[%s155 + $0x238] sm:$0xff]
      %v241 = vld [vmem:[%s155 + $0x240] sm:$0xff]
      %v242 = vld [vmem:[%s155 + $0x248] sm:$0xff]
      %v243 = vld [vmem:[%s155 + $0x250] sm:$0xff]
      %v244 = vld [vmem:[%s155 + $0x258] sm:$0xff]
      %v245 = vld [vmem:[%s155 + $0x260] sm:$0xff]
      %v246 = vld [vmem:[%s155 + $0x268] sm:$0xff]
      %v247 = vld [vmem:[%s155 + $0x270] sm:$0xff]
      %v248 = vld [vmem:[%s155 + $0x278] sm:$0xff]
      %v249 = vld [vmem:[%s155 + $0x280] sm:$0xff]
      %v250 = vld [vmem:[%s155 + $0x288] sm:$0xff]
      %v251 = vld [vmem:[%s155 + $0x290] sm:$0xff]
      %v252 = vld [vmem:[%s155 + $0x298] sm:$0xff]
      %v253 = vld [vmem:[%s155 + $0x2a0] sm:$0xff]
      %v254 = vld [vmem:[%s155 + $0x2a8] sm:$0xff]
      %v255 = vld [vmem:[%s155 + $0x2b0] sm:$0xff]
      %v256 = vld [vmem:[%s155 + $0x2b8] sm:$0xff]
      %v257 = vld [vmem:[%s155 + $0x2c0] sm:$0xff]
      %v258 = vld [vmem:[%s155 + $0x2c8] sm:$0xff]
      %v259 = vld [vmem:[%s155 + $0x2d0] sm:$0xff]
      %v260 = vld [vmem:[%s155 + $0x2d8] sm:$0xff]
      %v261 = vld [vmem:[%s155 + $0x2e0] sm:$0xff]
      %v262 = vld [vmem:[%s155 + $0x2e8] sm:$0xff]
      %v263 = vld [vmem:[%s155 + $0x2f0] sm:$0xff]
      %v264 = vld [vmem:[%s155 + $0x2f8] sm:$0xff]
      %v265 = vld [vmem:[%s155 + $0x300] sm:$0xff]
      %v266 = vld [vmem:[%s155 + $0x308] sm:$0xff]
      %v267 = vld [vmem:[%s155 + $0x310] sm:$0xff]
      %v268 = vld [vmem:[%s155 + $0x318] sm:$0xff]
      %v269 = vld [vmem:[%s155 + $0x320] sm:$0xff]
      %v270 = vld [vmem:[%s155 + $0x328] sm:$0xff]
      %v271 = vld [vmem:[%s155 + $0x330] sm:$0xff]
      %v272 = vld [vmem:[%s155 + $0x338] sm:$0xff]
      %v273 = vld [vmem:[%s155 + $0x340] sm:$0xff]
      %v274 = vld [vmem:[%s155 + $0x348] sm:$0xff]
      %v275 = vld [vmem:[%s155 + $0x350] sm:$0xff]
      %v276 = vld [vmem:[%s155 + $0x358] sm:$0xff]
      %v277 = vld [vmem:[%s155 + $0x360] sm:$0xff]
      %v278 = vld [vmem:[%s155 + $0x368] sm:$0xff]
      %v279 = vld [vmem:[%s155 + $0x370] sm:$0xff]
      %v280 = vld [vmem:[%s155 + $0x378] sm:$0xff]
      %v281 = vld [vmem:[%s155 + $0x380] sm:$0xff]
      %v282 = vld [vmem:[%s155 + $0x388] sm:$0xff]
      %v283 = vld [vmem:[%s155 + $0x390] sm:$0xff]
      %v284 = vld [vmem:[%s155 + $0x398] sm:$0xff]
      %v285 = vld [vmem:[%s155 + $0x3a0] sm:$0xff]
      %v286 = vld [vmem:[%s155 + $0x3a8] sm:$0xff]
      %v287 = vld [vmem:[%s155 + $0x3b0] sm:$0xff]
      %v288 = vld [vmem:[%s155 + $0x3b8] sm:$0xff]
      %v289 = vld [vmem:[%s155 + $0x3c0] sm:$0xff]
      %v290 = vld [vmem:[%s155 + $0x3c8] sm:$0xff]
      %v291 = vld [vmem:[%s155 + $0x3d0] sm:$0xff]
      %v292 = vld [vmem:[%s155 + $0x3d8] sm:$0xff]
      %v293 = vld [vmem:[%s155 + $0x3e0] sm:$0xff]
      %v294 = vld [vmem:[%s155 + $0x3e8] sm:$0xff]
      %v295 = vld [vmem:[%s155 + $0x3f0] sm:$0xff]
      %v296 = vld [vmem:[%s155 + $0x3f8] sm:$0xff]
      %v297 = vld [vmem:[%s155 + $0x400] sm:$0xff]
      %v298 = vld [vmem:[%s155 + $0x408] sm:$0xff]
      %v299 = vld [vmem:[%s155 + $0x410] sm:$0xff]
      %v300 = vld [vmem:[%s155 + $0x418] sm:$0xff]
      %v301 = vld [vmem:[%s155 + $0x420] sm:$0xff]
      %v302 = vld [vmem:[%s155 + $0x428] sm:$0xff]
      %v303 = vld [vmem:[%s155 + $0x430] sm:$0xff]
      %v304 = vld [vmem:[%s155 + $0x438] sm:$0xff]
      %v305 = vld [vmem:[%s155 + $0x440] sm:$0xff]
      %v306 = vld [vmem:[%s155 + $0x448] sm:$0xff]
      %v307 = vld [vmem:[%s155 + $0x450] sm:$0xff]
      %v308 = vld [vmem:[%s155 + $0x458] sm:$0xff]
      %v309 = vld [vmem:[%s155 + $0x460] sm:$0xff]
      %v310 = vld [vmem:[%s155 + $0x468] sm:$0xff]
      %v311 = vld [vmem:[%s155 + $0x470] sm:$0xff]
      %v312 = vld [vmem:[%s155 + $0x478] sm:$0xff]
      %v313 = vld [vmem:[%s155 + $0x480] sm:$0xff]
      %v314 = vld [vmem:[%s155 + $0x488] sm:$0xff]
      %v315 = vld [vmem:[%s155 + $0x490] sm:$0xff]
      %v316 = vld [vmem:[%s155 + $0x498] sm:$0xff]
      %v317 = vld [vmem:[%s155 + $0x4a0] sm:$0xff]
      %v318 = vld [vmem:[%s155 + $0x4a8] sm:$0xff]
      %v319 = vld [vmem:[%s155 + $0x4b0] sm:$0xff]
      %v320 = vld [vmem:[%s155 + $0x4b8] sm:$0xff]
      %v321 = vld [vmem:[%s155 + $0x4c0] sm:$0xff]
      %v322 = vld [vmem:[%s155 + $0x4c8] sm:$0xff]
      %v323 = vld [vmem:[%s155 + $0x4d0] sm:$0xff]
      %v324 = vld [vmem:[%s155 + $0x4d8] sm:$0xff]
      %v325 = vld [vmem:[%s155 + $0x4e0] sm:$0xff]
      %v326 = vld [vmem:[%s155 + $0x4e8] sm:$0xff]
      %v327 = vld [vmem:[%s155 + $0x4f0] sm:$0xff]
      %v328 = vld [vmem:[%s155 + $0x4f8] sm:$0xff]
      %v329 = vld [vmem:[%s155 + $0x500] sm:$0xff]
      %v330 = vld [vmem:[%s155 + $0x508] sm:$0xff]
      %v331 = vld [vmem:[%s155 + $0x510] sm:$0xff]
      %v332 = vld [vmem:[%s155 + $0x518] sm:$0xff]
      %v333 = vld [vmem:[%s155 + $0x520] sm:$0xff]
      %v334 = vld [vmem:[%s155 + $0x528] sm:$0xff]
      %v335 = vld [vmem:[%s155 + $0x530] sm:$0xff]
      %v336 = vld [vmem:[%s155 + $0x538] sm:$0xff]
      %v337 = vld [vmem:[%s155 + $0x540] sm:$0xff]
      %v338 = vld [vmem:[%s155 + $0x548] sm:$0xff]
      %v339 = vld [vmem:[%s155 + $0x550] sm:$0xff]
      %v340 = vld [vmem:[%s155 + $0x558] sm:$0xff]
      %v341 = vld [vmem:[%s155 + $0x560] sm:$0xff]
      %v342 = vld [vmem:[%s155 + $0x568] sm:$0xff]
      %v343 = vld [vmem:[%s155 + $0x570] sm:$0xff]
      %v344 = vld [vmem:[%s155 + $0x578] sm:$0xff]
      %v345 = vld [vmem:[%s155 + $0x580] sm:$0xff]
      %v346 = vld [vmem:[%s155 + $0x588] sm:$0xff]
      %v347 = vld [vmem:[%s155 + $0x590] sm:$0xff]
      %v348 = vld [vmem:[%s155 + $0x598] sm:$0xff]
      %v349 = vld [vmem:[%s155 + $0x5a0] sm:$0xff]
      %v350 = vld [vmem:[%s155 + $0x5a8] sm:$0xff]
      %v351 = vld [vmem:[%s155 + $0x5b0] sm:$0xff]
      %v352 = vld [vmem:[%s155 + $0x5b8] sm:$0xff]
      %v353 = vld [vmem:[%s155 + $0x5c0] sm:$0xff]
      %v354 = vld [vmem:[%s155 + $0x5c8] sm:$0xff]
      %v355 = vld [vmem:[%s155 + $0x5d0] sm:$0xff]
      %v356 = vld [vmem:[%s155 + $0x5d8] sm:$0xff]
      %v357 = vld [vmem:[%s155 + $0x5e0] sm:$0xff]
      %v358 = vld [vmem:[%s155 + $0x5e8] sm:$0xff]
      %v359 = vld [vmem:[%s155 + $0x5f0] sm:$0xff]
      %v360 = vld [vmem:[%s155 + $0x5f8] sm:$0xff]
      %v361 = vld [vmem:[%s155 + $0x600] sm:$0xff]
      %v362 = vld [vmem:[%s155 + $0x608] sm:$0xff]
      %v363 = vld [vmem:[%s155 + $0x610] sm:$0xff]
      %v364 = vld [vmem:[%s155 + $0x618] sm:$0xff]
      %v365 = vld [vmem:[%s155 + $0x620] sm:$0xff]
      %v366 = vld [vmem:[%s155 + $0x628] sm:$0xff]
      %v367 = vld [vmem:[%s155 + $0x630] sm:$0xff]
      %v368 = vld [vmem:[%s155 + $0x638] sm:$0xff]
      %v369 = vld [vmem:[%s155 + $0x640] sm:$0xff]
      %v370 = vld [vmem:[%s155 + $0x648] sm:$0xff]
      %v371 = vld [vmem:[%s155 + $0x650] sm:$0xff]
      %v372 = vld [vmem:[%s155 + $0x658] sm:$0xff]
      %v373 = vld [vmem:[%s155 + $0x660] sm:$0xff]
      %v374 = vld [vmem:[%s155 + $0x668] sm:$0xff]
      %v375 = vld [vmem:[%s155 + $0x670] sm:$0xff]
      %v376 = vld [vmem:[%s155 + $0x678] sm:$0xff]
      %v377 = vld [vmem:[%s155 + $0x680] sm:$0xff]
      %v378 = vld [vmem:[%s155 + $0x688] sm:$0xff]
      %v379 = vld [vmem:[%s155 + $0x690] sm:$0xff]
      %v380 = vld [vmem:[%s155 + $0x698] sm:$0xff]
      %v381 = vld [vmem:[%s155 + $0x6a0] sm:$0xff]
      %v382 = vld [vmem:[%s155 + $0x6a8] sm:$0xff]
      %v383 = vld [vmem:[%s155 + $0x6b0] sm:$0xff]
      %v384 = vld [vmem:[%s155 + $0x6b8] sm:$0xff]
      %v385 = vld [vmem:[%s155 + $0x6c0] sm:$0xff]
      %v386 = vld [vmem:[%s155 + $0x6c8] sm:$0xff]
      %v387 = vld [vmem:[%s155 + $0x6d0] sm:$0xff]
      %v388 = vld [vmem:[%s155 + $0x6d8] sm:$0xff]
      %v389 = vld [vmem:[%s155 + $0x6e0] sm:$0xff]
      %v390 = vld [vmem:[%s155 + $0x6e8] sm:$0xff]
      %v391 = vld [vmem:[%s155 + $0x6f0] sm:$0xff]
      %v392 = vld [vmem:[%s155 + $0x6f8] sm:$0xff]
      %v393 = vld [vmem:[%s155 + $0x700] sm:$0xff]
      %v394 = vld [vmem:[%s155 + $0x708] sm:$0xff]
      %v395 = vld [vmem:[%s155 + $0x710] sm:$0xff]
      %v396 = vld [vmem:[%s155 + $0x718] sm:$0xff]
      %v397 = vld [vmem:[%s155 + $0x720] sm:$0xff]
      %v398 = vld [vmem:[%s155 + $0x728] sm:$0xff]
      %v399 = vld [vmem:[%s155 + $0x730] sm:$0xff]
      %v400 = vld [vmem:[%s155 + $0x738] sm:$0xff]
      %v401 = vld [vmem:[%s155 + $0x740] sm:$0xff]
      %v402 = vld [vmem:[%s155 + $0x748] sm:$0xff]
      %v403 = vld [vmem:[%s155 + $0x750] sm:$0xff]
      %v404 = vld [vmem:[%s155 + $0x758] sm:$0xff]
      %v405 = vld [vmem:[%s155 + $0x760] sm:$0xff]
      %v406 = vld [vmem:[%s155 + $0x768] sm:$0xff]
      %v407 = vld [vmem:[%s155 + $0x770] sm:$0xff]
      %v408 = vld [vmem:[%s155 + $0x778] sm:$0xff]
      %v409 = vld [vmem:[%s155 + $0x780] sm:$0xff]
      %v410 = vld [vmem:[%s155 + $0x788] sm:$0xff]
      %v411 = vld [vmem:[%s155 + $0x790] sm:$0xff]
      %v412 = vld [vmem:[%s155 + $0x798] sm:$0xff]
      %v413 = vld [vmem:[%s155 + $0x7a0] sm:$0xff]
      %v414 = vld [vmem:[%s155 + $0x7a8] sm:$0xff]
      %v415 = vld [vmem:[%s155 + $0x7b0] sm:$0xff]
      %v416 = vld [vmem:[%s155 + $0x7b8] sm:$0xff]
      %v417 = vld [vmem:[%s155 + $0x7c0] sm:$0xff]
      %v418 = vld [vmem:[%s155 + $0x7c8] sm:$0xff]
      %v419 = vld [vmem:[%s155 + $0x7d0] sm:$0xff]
      %v420 = vld [vmem:[%s155 + $0x7d8] sm:$0xff]
      %v421 = vld [vmem:[%s155 + $0x7e0] sm:$0xff]
      %v422 = vld [vmem:[%s155 + $0x7e8] sm:$0xff]
      %v423 = vld [vmem:[%s155 + $0x7f0] sm:$0xff]
      %v424 = vld [vmem:[%s155 + $0x7f8] sm:$0xff]
      %v425 = vld [vmem:[%s161] sm:$0xff]
      %v426 = vld [vmem:[%s161 + $0x8] sm:$0xff]
      %v427 = vld [vmem:[%s161 + $0x10] sm:$0xff]
      %v428 = vld [vmem:[%s161 + $0x18] sm:$0xff]
      %v429 = vld [vmem:[%s161 + $0x20] sm:$0xff]
      %v430 = vld [vmem:[%s161 + $0x28] sm:$0xff]
      %v431 = vld [vmem:[%s161 + $0x30] sm:$0xff]
      %v432 = vld [vmem:[%s161 + $0x38] sm:$0xff]
      %v433 = vld [vmem:[%s161 + $0x40] sm:$0xff]
      %v434 = vld [vmem:[%s161 + $0x48] sm:$0xff]
      %v435 = vld [vmem:[%s161 + $0x50] sm:$0xff]
      %v436 = vld [vmem:[%s161 + $0x58] sm:$0xff]
      %v437 = vld [vmem:[%s161 + $0x60] sm:$0xff]
      %v438 = vld [vmem:[%s161 + $0x68] sm:$0xff]
      %v439 = vld [vmem:[%s161 + $0x70] sm:$0xff]
      %v440 = vld [vmem:[%s161 + $0x78] sm:$0xff]
      %v441 = vld [vmem:[%s161 + $0x80] sm:$0xff]
      %v442 = vld [vmem:[%s161 + $0x88] sm:$0xff]
      %v443 = vld [vmem:[%s161 + $0x90] sm:$0xff]
      %v444 = vld [vmem:[%s161 + $0x98] sm:$0xff]
      %v445 = vld [vmem:[%s161 + $0xa0] sm:$0xff]
      %v446 = vld [vmem:[%s161 + $0xa8] sm:$0xff]
      %v447 = vld [vmem:[%s161 + $0xb0] sm:$0xff]
      %v448 = vld [vmem:[%s161 + $0xb8] sm:$0xff]
      %v449 = vld [vmem:[%s161 + $0xc0] sm:$0xff]
      %v450 = vld [vmem:[%s161 + $0xc8] sm:$0xff]
      %v451 = vld [vmem:[%s161 + $0xd0] sm:$0xff]
      %v452 = vld [vmem:[%s161 + $0xd8] sm:$0xff]
      %v453 = vld [vmem:[%s161 + $0xe0] sm:$0xff]
      %v454 = vld [vmem:[%s161 + $0xe8] sm:$0xff]
      %v455 = vld [vmem:[%s161 + $0xf0] sm:$0xff]
      %v456 = vld [vmem:[%s161 + $0xf8] sm:$0xff]
      %v457 = vld [vmem:[%s161 + $0x100] sm:$0xff]
      %v458 = vld [vmem:[%s161 + $0x108] sm:$0xff]
      %v459 = vld [vmem:[%s161 + $0x110] sm:$0xff]
      %v460 = vld [vmem:[%s161 + $0x118] sm:$0xff]
      %v461 = vld [vmem:[%s161 + $0x120] sm:$0xff]
      %v462 = vld [vmem:[%s161 + $0x128] sm:$0xff]
      %v463 = vld [vmem:[%s161 + $0x130] sm:$0xff]
      %v464 = vld [vmem:[%s161 + $0x138] sm:$0xff]
      %v465 = vld [vmem:[%s161 + $0x140] sm:$0xff]
      %v466 = vld [vmem:[%s161 + $0x148] sm:$0xff]
      %v467 = vld [vmem:[%s161 + $0x150] sm:$0xff]
      %v468 = vld [vmem:[%s161 + $0x158] sm:$0xff]
      %v469 = vld [vmem:[%s161 + $0x160] sm:$0xff]
      %v470 = vld [vmem:[%s161 + $0x168] sm:$0xff]
      %v471 = vld [vmem:[%s161 + $0x170] sm:$0xff]
      %v472 = vld [vmem:[%s161 + $0x178] sm:$0xff]
      %v473 = vld [vmem:[%s161 + $0x180] sm:$0xff]
      %v474 = vld [vmem:[%s161 + $0x188] sm:$0xff]
      %v475 = vld [vmem:[%s161 + $0x190] sm:$0xff]
      %v476 = vld [vmem:[%s161 + $0x198] sm:$0xff]
      %v477 = vld [vmem:[%s161 + $0x1a0] sm:$0xff]
      %v478 = vld [vmem:[%s161 + $0x1a8] sm:$0xff]
      %v479 = vld [vmem:[%s161 + $0x1b0] sm:$0xff]
      %v480 = vld [vmem:[%s161 + $0x1b8] sm:$0xff]
      %v481 = vld [vmem:[%s161 + $0x1c0] sm:$0xff]
      %v482 = vld [vmem:[%s161 + $0x1c8] sm:$0xff]
      %v483 = vld [vmem:[%s161 + $0x1d0] sm:$0xff]
      %v484 = vld [vmem:[%s161 + $0x1d8] sm:$0xff]
      %v485 = vld [vmem:[%s161 + $0x1e0] sm:$0xff]
      %v486 = vld [vmem:[%s161 + $0x1e8] sm:$0xff]
      %v487 = vld [vmem:[%s161 + $0x1f0] sm:$0xff]
      %v488 = vld [vmem:[%s161 + $0x1f8] sm:$0xff]
      %v489 = vld [vmem:[%s161 + $0x200] sm:$0xff]
      %v490 = vld [vmem:[%s161 + $0x208] sm:$0xff]
      %v491 = vld [vmem:[%s161 + $0x210] sm:$0xff]
      %v492 = vld [vmem:[%s161 + $0x218] sm:$0xff]
      %v493 = vld [vmem:[%s161 + $0x220] sm:$0xff]
      %v494 = vld [vmem:[%s161 + $0x228] sm:$0xff]
      %v495 = vld [vmem:[%s161 + $0x230] sm:$0xff]
      %v496 = vld [vmem:[%s161 + $0x238] sm:$0xff]
      %v497 = vld [vmem:[%s161 + $0x240] sm:$0xff]
      %v498 = vld [vmem:[%s161 + $0x248] sm:$0xff]
      %v499 = vld [vmem:[%s161 + $0x250] sm:$0xff]
      %v500 = vld [vmem:[%s161 + $0x258] sm:$0xff]
      %v501 = vld [vmem:[%s161 + $0x260] sm:$0xff]
      %v502 = vld [vmem:[%s161 + $0x268] sm:$0xff]
      %v503 = vld [vmem:[%s161 + $0x270] sm:$0xff]
      %v504 = vld [vmem:[%s161 + $0x278] sm:$0xff]
      %v505 = vld [vmem:[%s161 + $0x280] sm:$0xff]
      %v506 = vld [vmem:[%s161 + $0x288] sm:$0xff]
      %v507 = vld [vmem:[%s161 + $0x290] sm:$0xff]
      %v508 = vld [vmem:[%s161 + $0x298] sm:$0xff]
      %v509 = vld [vmem:[%s161 + $0x2a0] sm:$0xff]
      %v510 = vld [vmem:[%s161 + $0x2a8] sm:$0xff]
      %v511 = vld [vmem:[%s161 + $0x2b0] sm:$0xff]
      %v512 = vld [vmem:[%s161 + $0x2b8] sm:$0xff]
      %v513 = vld [vmem:[%s161 + $0x2c0] sm:$0xff]
      %v514 = vld [vmem:[%s161 + $0x2c8] sm:$0xff]
      %v515 = vld [vmem:[%s161 + $0x2d0] sm:$0xff]
      %v516 = vld [vmem:[%s161 + $0x2d8] sm:$0xff]
      %v517 = vld [vmem:[%s161 + $0x2e0] sm:$0xff]
      %v518 = vld [vmem:[%s161 + $0x2e8] sm:$0xff]
      %v519 = vld [vmem:[%s161 + $0x2f0] sm:$0xff]
      %v520 = vld [vmem:[%s161 + $0x2f8] sm:$0xff]
      %v521 = vld [vmem:[%s161 + $0x300] sm:$0xff]
      %v522 = vld [vmem:[%s161 + $0x308] sm:$0xff]
      %v523 = vld [vmem:[%s161 + $0x310] sm:$0xff]
      %v524 = vld [vmem:[%s161 + $0x318] sm:$0xff]
      %v525 = vld [vmem:[%s161 + $0x320] sm:$0xff]
      %v526 = vld [vmem:[%s161 + $0x328] sm:$0xff]
      %v527 = vld [vmem:[%s161 + $0x330] sm:$0xff]
      %v528 = vld [vmem:[%s161 + $0x338] sm:$0xff]
      %v529 = vld [vmem:[%s161 + $0x340] sm:$0xff]
      %v530 = vld [vmem:[%s161 + $0x348] sm:$0xff]
      %v531 = vld [vmem:[%s161 + $0x350] sm:$0xff]
      %v532 = vld [vmem:[%s161 + $0x358] sm:$0xff]
      %v533 = vld [vmem:[%s161 + $0x360] sm:$0xff]
      %v534 = vld [vmem:[%s161 + $0x368] sm:$0xff]
      %v535 = vld [vmem:[%s161 + $0x370] sm:$0xff]
      %v536 = vld [vmem:[%s161 + $0x378] sm:$0xff]
      %v537 = vld [vmem:[%s161 + $0x380] sm:$0xff]
      %v538 = vld [vmem:[%s161 + $0x388] sm:$0xff]
      %v539 = vld [vmem:[%s161 + $0x390] sm:$0xff]
      %v540 = vld [vmem:[%s161 + $0x398] sm:$0xff]
      %v541 = vld [vmem:[%s161 + $0x3a0] sm:$0xff]
      %v542 = vld [vmem:[%s161 + $0x3a8] sm:$0xff]
      %v543 = vld [vmem:[%s161 + $0x3b0] sm:$0xff]
      %v544 = vld [vmem:[%s161 + $0x3b8] sm:$0xff]
      %v545 = vld [vmem:[%s161 + $0x3c0] sm:$0xff]
      %v546 = vld [vmem:[%s161 + $0x3c8] sm:$0xff]
      %v547 = vld [vmem:[%s161 + $0x3d0] sm:$0xff]
      %v548 = vld [vmem:[%s161 + $0x3d8] sm:$0xff]
      %v549 = vld [vmem:[%s161 + $0x3e0] sm:$0xff]
      %v550 = vld [vmem:[%s161 + $0x3e8] sm:$0xff]
      %v551 = vld [vmem:[%s161 + $0x3f0] sm:$0xff]
      %v552 = vld [vmem:[%s161 + $0x3f8] sm:$0xff]
      %v553 = vld [vmem:[%s161 + $0x400] sm:$0xff]
      %v554 = vld [vmem:[%s161 + $0x408] sm:$0xff]
      %v555 = vld [vmem:[%s161 + $0x410] sm:$0xff]
      %v556 = vld [vmem:[%s161 + $0x418] sm:$0xff]
      %v557 = vld [vmem:[%s161 + $0x420] sm:$0xff]
      %v558 = vld [vmem:[%s161 + $0x428] sm:$0xff]
      %v559 = vld [vmem:[%s161 + $0x430] sm:$0xff]
      %v560 = vld [vmem:[%s161 + $0x438] sm:$0xff]
      %v561 = vld [vmem:[%s161 + $0x440] sm:$0xff]
      %v562 = vld [vmem:[%s161 + $0x448] sm:$0xff]
      %v563 = vld [vmem:[%s161 + $0x450] sm:$0xff]
      %v564 = vld [vmem:[%s161 + $0x458] sm:$0xff]
      %v565 = vld [vmem:[%s161 + $0x460] sm:$0xff]
      %v566 = vld [vmem:[%s161 + $0x468] sm:$0xff]
      %v567 = vld [vmem:[%s161 + $0x470] sm:$0xff]
      %v568 = vld [vmem:[%s161 + $0x478] sm:$0xff]
      %v569 = vld [vmem:[%s161 + $0x480] sm:$0xff]
      %v570 = vld [vmem:[%s161 + $0x488] sm:$0xff]
      %v571 = vld [vmem:[%s161 + $0x490] sm:$0xff]
      %v572 = vld [vmem:[%s161 + $0x498] sm:$0xff]
      %v573 = vld [vmem:[%s161 + $0x4a0] sm:$0xff]
      %v574 = vld [vmem:[%s161 + $0x4a8] sm:$0xff]
      %v575 = vld [vmem:[%s161 + $0x4b0] sm:$0xff]
      %v576 = vld [vmem:[%s161 + $0x4b8] sm:$0xff]
      %v577 = vld [vmem:[%s161 + $0x4c0] sm:$0xff]
      %v578 = vld [vmem:[%s161 + $0x4c8] sm:$0xff]
      %v579 = vld [vmem:[%s161 + $0x4d0] sm:$0xff]
      %v580 = vld [vmem:[%s161 + $0x4d8] sm:$0xff]
      %v581 = vld [vmem:[%s161 + $0x4e0] sm:$0xff]
      %v582 = vld [vmem:[%s161 + $0x4e8] sm:$0xff]
      %v583 = vld [vmem:[%s161 + $0x4f0] sm:$0xff]
      %v584 = vld [vmem:[%s161 + $0x4f8] sm:$0xff]
      %v585 = vld [vmem:[%s161 + $0x500] sm:$0xff]
      %v586 = vld [vmem:[%s161 + $0x508] sm:$0xff]
      %v587 = vld [vmem:[%s161 + $0x510] sm:$0xff]
      %v588 = vld [vmem:[%s161 + $0x518] sm:$0xff]
      %v589 = vld [vmem:[%s161 + $0x520] sm:$0xff]
      %v590 = vld [vmem:[%s161 + $0x528] sm:$0xff]
      %v591 = vld [vmem:[%s161 + $0x530] sm:$0xff]
      %v592 = vld [vmem:[%s161 + $0x538] sm:$0xff]
      %v593 = vld [vmem:[%s161 + $0x540] sm:$0xff]
      %v594 = vld [vmem:[%s161 + $0x548] sm:$0xff]
      %v595 = vld [vmem:[%s161 + $0x550] sm:$0xff]
      %v596 = vld [vmem:[%s161 + $0x558] sm:$0xff]
      %v597 = vld [vmem:[%s161 + $0x560] sm:$0xff]
      %v598 = vld [vmem:[%s161 + $0x568] sm:$0xff]
      %v599 = vld [vmem:[%s161 + $0x570] sm:$0xff]
      %v600 = vld [vmem:[%s161 + $0x578] sm:$0xff]
      %v601 = vld [vmem:[%s161 + $0x580] sm:$0xff]
      %v602 = vld [vmem:[%s161 + $0x588] sm:$0xff]
      %v603 = vld [vmem:[%s161 + $0x590] sm:$0xff]
      %v604 = vld [vmem:[%s161 + $0x598] sm:$0xff]
      %v605 = vld [vmem:[%s161 + $0x5a0] sm:$0xff]
      %v606 = vld [vmem:[%s161 + $0x5a8] sm:$0xff]
      %v607 = vld [vmem:[%s161 + $0x5b0] sm:$0xff]
      %v608 = vld [vmem:[%s161 + $0x5b8] sm:$0xff]
      %v609 = vld [vmem:[%s161 + $0x5c0] sm:$0xff]
      %v610 = vld [vmem:[%s161 + $0x5c8] sm:$0xff]
      %v611 = vld [vmem:[%s161 + $0x5d0] sm:$0xff]
      %v612 = vld [vmem:[%s161 + $0x5d8] sm:$0xff]
      %v613 = vld [vmem:[%s161 + $0x5e0] sm:$0xff]
      %v614 = vld [vmem:[%s161 + $0x5e8] sm:$0xff]
      %v615 = vld [vmem:[%s161 + $0x5f0] sm:$0xff]
      %v616 = vld [vmem:[%s161 + $0x5f8] sm:$0xff]
      %v617 = vld [vmem:[%s161 + $0x600] sm:$0xff]
      %v618 = vld [vmem:[%s161 + $0x608] sm:$0xff]
      %v619 = vld [vmem:[%s161 + $0x610] sm:$0xff]
      %v620 = vld [vmem:[%s161 + $0x618] sm:$0xff]
      %v621 = vld [vmem:[%s161 + $0x620] sm:$0xff]
      %v622 = vld [vmem:[%s161 + $0x628] sm:$0xff]
      %v623 = vld [vmem:[%s161 + $0x630] sm:$0xff]
      %v624 = vld [vmem:[%s161 + $0x638] sm:$0xff]
      %v625 = vld [vmem:[%s161 + $0x640] sm:$0xff]
      %v626 = vld [vmem:[%s161 + $0x648] sm:$0xff]
      %v627 = vld [vmem:[%s161 + $0x650] sm:$0xff]
      %v628 = vld [vmem:[%s161 + $0x658] sm:$0xff]
      %v629 = vld [vmem:[%s161 + $0x660] sm:$0xff]
      %v630 = vld [vmem:[%s161 + $0x668] sm:$0xff]
      %v631 = vld [vmem:[%s161 + $0x670] sm:$0xff]
      %v632 = vld [vmem:[%s161 + $0x678] sm:$0xff]
      %v633 = vld [vmem:[%s161 + $0x680] sm:$0xff]
      %v634 = vld [vmem:[%s161 + $0x688] sm:$0xff]
      %v635 = vld [vmem:[%s161 + $0x690] sm:$0xff]
      %v636 = vld [vmem:[%s161 + $0x698] sm:$0xff]
      %v637 = vld [vmem:[%s161 + $0x6a0] sm:$0xff]
      %v638 = vld [vmem:[%s161 + $0x6a8] sm:$0xff]
      %v639 = vld [vmem:[%s161 + $0x6b0] sm:$0xff]
      %v640 = vld [vmem:[%s161 + $0x6b8] sm:$0xff]
      %v641 = vld [vmem:[%s161 + $0x6c0] sm:$0xff]
      %v642 = vld [vmem:[%s161 + $0x6c8] sm:$0xff]
      %v643 = vld [vmem:[%s161 + $0x6d0] sm:$0xff]
      %v644 = vld [vmem:[%s161 + $0x6d8] sm:$0xff]
      %v645 = vld [vmem:[%s161 + $0x6e0] sm:$0xff]
      %v646 = vld [vmem:[%s161 + $0x6e8] sm:$0xff]
      %v647 = vld [vmem:[%s161 + $0x6f0] sm:$0xff]
      %v648 = vld [vmem:[%s161 + $0x6f8] sm:$0xff]
      %v649 = vld [vmem:[%s161 + $0x700] sm:$0xff]
      %v650 = vld [vmem:[%s161 + $0x708] sm:$0xff]
      %v651 = vld [vmem:[%s161 + $0x710] sm:$0xff]
      %v652 = vld [vmem:[%s161 + $0x718] sm:$0xff]
      %v653 = vld [vmem:[%s161 + $0x720] sm:$0xff]
      %v654 = vld [vmem:[%s161 + $0x728] sm:$0xff]
      %v655 = vld [vmem:[%s161 + $0x730] sm:$0xff]
      %v656 = vld [vmem:[%s161 + $0x738] sm:$0xff]
      %v657 = vld [vmem:[%s161 + $0x740] sm:$0xff]
      %v658 = vld [vmem:[%s161 + $0x748] sm:$0xff]
      %v659 = vld [vmem:[%s161 + $0x750] sm:$0xff]
      %v660 = vld [vmem:[%s161 + $0x758] sm:$0xff]
      %v661 = vld [vmem:[%s161 + $0x760] sm:$0xff]
      %v662 = vld [vmem:[%s161 + $0x768] sm:$0xff]
      %v663 = vld [vmem:[%s161 + $0x770] sm:$0xff]
      %v664 = vld [vmem:[%s161 + $0x778] sm:$0xff]
      %v665 = vld [vmem:[%s161 + $0x780] sm:$0xff]
      %v666 = vld [vmem:[%s161 + $0x788] sm:$0xff]
      %v667 = vld [vmem:[%s161 + $0x790] sm:$0xff]
      %v668 = vld [vmem:[%s161 + $0x798] sm:$0xff]
      %v669 = vld [vmem:[%s161 + $0x7a0] sm:$0xff]
      %v670 = vld [vmem:[%s161 + $0x7a8] sm:$0xff]
      %v671 = vld [vmem:[%s161 + $0x7b0] sm:$0xff]
      %v672 = vld [vmem:[%s161 + $0x7b8] sm:$0xff]
      %v673 = vld [vmem:[%s161 + $0x7c0] sm:$0xff]
      %v674 = vld [vmem:[%s161 + $0x7c8] sm:$0xff]
      %v675 = vld [vmem:[%s161 + $0x7d0] sm:$0xff]
      %v676 = vld [vmem:[%s161 + $0x7d8] sm:$0xff]
      %v677 = vld [vmem:[%s161 + $0x7e0] sm:$0xff]
      %v678 = vld [vmem:[%s161 + $0x7e8] sm:$0xff]
      %v679 = vld [vmem:[%s161 + $0x7f0] sm:$0xff]
      %v680 = vld [vmem:[%s161 + $0x7f8] sm:$0xff]
      %v681 = vmul.f32 %v169, %v425
      %v682 = vmul.f32 %v170, %v426
      %v683 = vmul.f32 %v171, %v427
      %v684 = vmul.f32 %v172, %v428
      %v685 = vmul.f32 %v173, %v429
      %v686 = vmul.f32 %v174, %v430
      %v687 = vmul.f32 %v175, %v431
      %v688 = vmul.f32 %v176, %v432
      %v689 = vmul.f32 %v177, %v433
      %v690 = vmul.f32 %v178, %v434
      %v691 = vmul.f32 %v179, %v435
      %v692 = vmul.f32 %v180, %v436
      %v693 = vmul.f32 %v181, %v437
      %v694 = vmul.f32 %v182, %v438
      %v695 = vmul.f32 %v183, %v439
      %v696 = vmul.f32 %v184, %v440
      %v697 = vmul.f32 %v185, %v441
      %v698 = vmul.f32 %v186, %v442
      %v699 = vmul.f32 %v187, %v443
      %v700 = vmul.f32 %v188, %v444
      %v701 = vmul.f32 %v189, %v445
      %v702 = vmul.f32 %v190, %v446
      %v703 = vmul.f32 %v191, %v447
      %v704 = vmul.f32 %v192, %v448
      %v705 = vmul.f32 %v193, %v449
      %v706 = vmul.f32 %v194, %v450
      %v707 = vmul.f32 %v195, %v451
      %v708 = vmul.f32 %v196, %v452
      %v709 = vmul.f32 %v197, %v453
      %v710 = vmul.f32 %v198, %v454
      %v711 = vmul.f32 %v199, %v455
      %v712 = vmul.f32 %v200, %v456
      %v713 = vmul.f32 %v201, %v457
      %v714 = vmul.f32 %v202, %v458
      %v715 = vmul.f32 %v203, %v459
      %v716 = vmul.f32 %v204, %v460
      %v717 = vmul.f32 %v205, %v461
      %v718 = vmul.f32 %v206, %v462
      %v719 = vmul.f32 %v207, %v463
      %v720 = vmul.f32 %v208, %v464
      %v721 = vmul.f32 %v209, %v465
      %v722 = vmul.f32 %v210, %v466
      %v723 = vmul.f32 %v211, %v467
      %v724 = vmul.f32 %v212, %v468
      %v725 = vmul.f32 %v213, %v469
      %v726 = vmul.f32 %v214, %v470
      %v727 = vmul.f32 %v215, %v471
      %v728 = vmul.f32 %v216, %v472
      %v729 = vmul.f32 %v217, %v473
      %v730 = vmul.f32 %v218, %v474
      %v731 = vmul.f32 %v219, %v475
      %v732 = vmul.f32 %v220, %v476
      %v733 = vmul.f32 %v221, %v477
      %v734 = vmul.f32 %v222, %v478
      %v735 = vmul.f32 %v223, %v479
      %v736 = vmul.f32 %v224, %v480
      %v737 = vmul.f32 %v225, %v481
      %v738 = vmul.f32 %v226, %v482
      %v739 = vmul.f32 %v227, %v483
      %v740 = vmul.f32 %v228, %v484
      %v741 = vmul.f32 %v229, %v485
      %v742 = vmul.f32 %v230, %v486
      %v743 = vmul.f32 %v231, %v487
      %v744 = vmul.f32 %v232, %v488
      %v745 = vmul.f32 %v233, %v489
      %v746 = vmul.f32 %v234, %v490
      %v747 = vmul.f32 %v235, %v491
      %v748 = vmul.f32 %v236, %v492
      %v749 = vmul.f32 %v237, %v493
      %v750 = vmul.f32 %v238, %v494
      %v751 = vmul.f32 %v239, %v495
      %v752 = vmul.f32 %v240, %v496
      %v753 = vmul.f32 %v241, %v497
      %v754 = vmul.f32 %v242, %v498
      %v755 = vmul.f32 %v243, %v499
      %v756 = vmul.f32 %v244, %v500
      %v757 = vmul.f32 %v245, %v501
      %v758 = vmul.f32 %v246, %v502
      %v759 = vmul.f32 %v247, %v503
      %v760 = vmul.f32 %v248, %v504
      %v761 = vmul.f32 %v249, %v505
      %v762 = vmul.f32 %v250, %v506
      %v763 = vmul.f32 %v251, %v507
      %v764 = vmul.f32 %v252, %v508
      %v765 = vmul.f32 %v253, %v509
      %v766 = vmul.f32 %v254, %v510
      %v767 = vmul.f32 %v255, %v511
      %v768 = vmul.f32 %v256, %v512
      %v769 = vmul.f32 %v257, %v513
      %v770 = vmul.f32 %v258, %v514
      %v771 = vmul.f32 %v259, %v515
      %v772 = vmul.f32 %v260, %v516
      %v773 = vmul.f32 %v261, %v517
      %v774 = vmul.f32 %v262, %v518
      %v775 = vmul.f32 %v263, %v519
      %v776 = vmul.f32 %v264, %v520
      %v777 = vmul.f32 %v265, %v521
      %v778 = vmul.f32 %v266, %v522
      %v779 = vmul.f32 %v267, %v523
      %v780 = vmul.f32 %v268, %v524
      %v781 = vmul.f32 %v269, %v525
      %v782 = vmul.f32 %v270, %v526
      %v783 = vmul.f32 %v271, %v527
      %v784 = vmul.f32 %v272, %v528
      %v785 = vmul.f32 %v273, %v529
      %v786 = vmul.f32 %v274, %v530
      %v787 = vmul.f32 %v275, %v531
      %v788 = vmul.f32 %v276, %v532
      %v789 = vmul.f32 %v277, %v533
      %v790 = vmul.f32 %v278, %v534
      %v791 = vmul.f32 %v279, %v535
      %v792 = vmul.f32 %v280, %v536
      %v793 = vmul.f32 %v281, %v537
      %v794 = vmul.f32 %v282, %v538
      %v795 = vmul.f32 %v283, %v539
      %v796 = vmul.f32 %v284, %v540
      %v797 = vmul.f32 %v285, %v541
      %v798 = vmul.f32 %v286, %v542
      %v799 = vmul.f32 %v287, %v543
      %v800 = vmul.f32 %v288, %v544
      %v801 = vmul.f32 %v289, %v545
      %v802 = vmul.f32 %v290, %v546
      %v803 = vmul.f32 %v291, %v547
      %v804 = vmul.f32 %v292, %v548
      %v805 = vmul.f32 %v293, %v549
      %v806 = vmul.f32 %v294, %v550
      %v807 = vmul.f32 %v295, %v551
      %v808 = vmul.f32 %v296, %v552
      %v809 = vmul.f32 %v297, %v553
      %v810 = vmul.f32 %v298, %v554
      %v811 = vmul.f32 %v299, %v555
      %v812 = vmul.f32 %v300, %v556
      %v813 = vmul.f32 %v301, %v557
      %v814 = vmul.f32 %v302, %v558
      %v815 = vmul.f32 %v303, %v559
      %v816 = vmul.f32 %v304, %v560
      %v817 = vmul.f32 %v305, %v561
      %v818 = vmul.f32 %v306, %v562
      %v819 = vmul.f32 %v307, %v563
      %v820 = vmul.f32 %v308, %v564
      %v821 = vmul.f32 %v309, %v565
      %v822 = vmul.f32 %v310, %v566
      %v823 = vmul.f32 %v311, %v567
      %v824 = vmul.f32 %v312, %v568
      %v825 = vmul.f32 %v313, %v569
      %v826 = vmul.f32 %v314, %v570
      %v827 = vmul.f32 %v315, %v571
      %v828 = vmul.f32 %v316, %v572
      %v829 = vmul.f32 %v317, %v573
      %v830 = vmul.f32 %v318, %v574
      %v831 = vmul.f32 %v319, %v575
      %v832 = vmul.f32 %v320, %v576
      %v833 = vmul.f32 %v321, %v577
      %v834 = vmul.f32 %v322, %v578
      %v835 = vmul.f32 %v323, %v579
      %v836 = vmul.f32 %v324, %v580
      %v837 = vmul.f32 %v325, %v581
      %v838 = vmul.f32 %v326, %v582
      %v839 = vmul.f32 %v327, %v583
      %v840 = vmul.f32 %v328, %v584
      %v841 = vmul.f32 %v329, %v585
      %v842 = vmul.f32 %v330, %v586
      %v843 = vmul.f32 %v331, %v587
      %v844 = vmul.f32 %v332, %v588
      %v845 = vmul.f32 %v333, %v589
      %v846 = vmul.f32 %v334, %v590
      %v847 = vmul.f32 %v335, %v591
      %v848 = vmul.f32 %v336, %v592
      %v849 = vmul.f32 %v337, %v593
      %v850 = vmul.f32 %v338, %v594
      %v851 = vmul.f32 %v339, %v595
      %v852 = vmul.f32 %v340, %v596
      %v853 = vmul.f32 %v341, %v597
      %v854 = vmul.f32 %v342, %v598
      %v855 = vmul.f32 %v343, %v599
      %v856 = vmul.f32 %v344, %v600
      %v857 = vmul.f32 %v345, %v601
      %v858 = vmul.f32 %v346, %v602
      %v859 = vmul.f32 %v347, %v603
      %v860 = vmul.f32 %v348, %v604
      %v861 = vmul.f32 %v349, %v605
      %v862 = vmul.f32 %v350, %v606
      %v863 = vmul.f32 %v351, %v607
      %v864 = vmul.f32 %v352, %v608
      %v865 = vmul.f32 %v353, %v609
      %v866 = vmul.f32 %v354, %v610
      %v867 = vmul.f32 %v355, %v611
      %v868 = vmul.f32 %v356, %v612
      %v869 = vmul.f32 %v357, %v613
      %v870 = vmul.f32 %v358, %v614
      %v871 = vmul.f32 %v359, %v615
      %v872 = vmul.f32 %v360, %v616
      %v873 = vmul.f32 %v361, %v617
      %v874 = vmul.f32 %v362, %v618
      %v875 = vmul.f32 %v363, %v619
      %v876 = vmul.f32 %v364, %v620
      %v877 = vmul.f32 %v365, %v621
      %v878 = vmul.f32 %v366, %v622
      %v879 = vmul.f32 %v367, %v623
      %v880 = vmul.f32 %v368, %v624
      %v881 = vmul.f32 %v369, %v625
      %v882 = vmul.f32 %v370, %v626
      %v883 = vmul.f32 %v371, %v627
      %v884 = vmul.f32 %v372, %v628
      %v885 = vmul.f32 %v373, %v629
      %v886 = vmul.f32 %v374, %v630
      %v887 = vmul.f32 %v375, %v631
      %v888 = vmul.f32 %v376, %v632
      %v889 = vmul.f32 %v377, %v633
      %v890 = vmul.f32 %v378, %v634
      %v891 = vmul.f32 %v379, %v635
      %v892 = vmul.f32 %v380, %v636
      %v893 = vmul.f32 %v381, %v637
      %v894 = vmul.f32 %v382, %v638
      %v895 = vmul.f32 %v383, %v639
      %v896 = vmul.f32 %v384, %v640
      %v897 = vmul.f32 %v385, %v641
      %v898 = vmul.f32 %v386, %v642
      %v899 = vmul.f32 %v387, %v643
      %v900 = vmul.f32 %v388, %v644
      %v901 = vmul.f32 %v389, %v645
      %v902 = vmul.f32 %v390, %v646
      %v903 = vmul.f32 %v391, %v647
      %v904 = vmul.f32 %v392, %v648
      %v905 = vmul.f32 %v393, %v649
      %v906 = vmul.f32 %v394, %v650
      %v907 = vmul.f32 %v395, %v651
      %v908 = vmul.f32 %v396, %v652
      %v909 = vmul.f32 %v397, %v653
      %v910 = vmul.f32 %v398, %v654
      %v911 = vmul.f32 %v399, %v655
      %v912 = vmul.f32 %v400, %v656
      %v913 = vmul.f32 %v401, %v657
      %v914 = vmul.f32 %v402, %v658
      %v915 = vmul.f32 %v403, %v659
      %v916 = vmul.f32 %v404, %v660
      %v917 = vmul.f32 %v405, %v661
      %v918 = vmul.f32 %v406, %v662
      %v919 = vmul.f32 %v407, %v663
      %v920 = vmul.f32 %v408, %v664
      %v921 = vmul.f32 %v409, %v665
      %v922 = vmul.f32 %v410, %v666
      %v923 = vmul.f32 %v411, %v667
      %v924 = vmul.f32 %v412, %v668
      %v925 = vmul.f32 %v413, %v669
      %v926 = vmul.f32 %v414, %v670
      %v927 = vmul.f32 %v415, %v671
      %v928 = vmul.f32 %v416, %v672
      %v929 = vmul.f32 %v417, %v673
      %v930 = vmul.f32 %v418, %v674
      %v931 = vmul.f32 %v419, %v675
      %v932 = vmul.f32 %v420, %v676
      %v933 = vmul.f32 %v421, %v677
      %v934 = vmul.f32 %v422, %v678
      %v935 = vmul.f32 %v423, %v679
      %v936 = vmul.f32 %v424, %v680
      %vm937 = vcmask 261120
      %v938 = vsel %vm937, %v681, 0.0
      %939 = vadd.xlane.f32.xlu0 %v938
      %v940 = vpop.xlane.xlu0 %939
      %v941 = vsel %vm937, %v682, 0.0
      %942 = vadd.xlane.f32.xlu0 %v941
      %v943 = vpop.xlane.xlu0 %942
      %v944 = vsel %vm937, %v683, 0.0
      %945 = vadd.xlane.f32.xlu0 %v944
      %v946 = vpop.xlane.xlu0 %945
      %v947 = vsel %vm937, %v684, 0.0
      %948 = vadd.xlane.f32.xlu0 %v947
      %v949 = vpop.xlane.xlu0 %948
      %v950 = vsel %vm937, %v685, 0.0
      %951 = vadd.xlane.f32.xlu0 %v950
      %v952 = vpop.xlane.xlu0 %951
      %v953 = vsel %vm937, %v686, 0.0
      %954 = vadd.xlane.f32.xlu0 %v953
      %v955 = vpop.xlane.xlu0 %954
      %v956 = vsel %vm937, %v687, 0.0
      %957 = vadd.xlane.f32.xlu0 %v956
      %v958 = vpop.xlane.xlu0 %957
      %v959 = vsel %vm937, %v688, 0.0
      %960 = vadd.xlane.f32.xlu0 %v959
      %v961 = vpop.xlane.xlu0 %960
      %v962 = vsel %vm937, %v689, 0.0
      %963 = vadd.xlane.f32.xlu0 %v962
      %v964 = vpop.xlane.xlu0 %963
      %v965 = vsel %vm937, %v690, 0.0
      %966 = vadd.xlane.f32.xlu0 %v965
      %v967 = vpop.xlane.xlu0 %966
      %v968 = vsel %vm937, %v691, 0.0
      %969 = vadd.xlane.f32.xlu0 %v968
      %v970 = vpop.xlane.xlu0 %969
      %v971 = vsel %vm937, %v692, 0.0
      %972 = vadd.xlane.f32.xlu0 %v971
      %v973 = vpop.xlane.xlu0 %972
      %v974 = vsel %vm937, %v693, 0.0
      %975 = vadd.xlane.f32.xlu0 %v974
      %v976 = vpop.xlane.xlu0 %975
      %v977 = vsel %vm937, %v694, 0.0
      %978 = vadd.xlane.f32.xlu0 %v977
      %v979 = vpop.xlane.xlu0 %978
      %v980 = vsel %vm937, %v695, 0.0
      %981 = vadd.xlane.f32.xlu0 %v980
      %v982 = vpop.xlane.xlu0 %981
      %v983 = vsel %vm937, %v696, 0.0
      %984 = vadd.xlane.f32.xlu0 %v983
      %v985 = vpop.xlane.xlu0 %984
      %v986 = vsel %vm937, %v697, 0.0
      %987 = vadd.xlane.f32.xlu0 %v986
      %v988 = vpop.xlane.xlu0 %987
      %v989 = vsel %vm937, %v698, 0.0
      %990 = vadd.xlane.f32.xlu0 %v989
      %v991 = vpop.xlane.xlu0 %990
      %v992 = vsel %vm937, %v699, 0.0
      %993 = vadd.xlane.f32.xlu0 %v992
      %v994 = vpop.xlane.xlu0 %993
      %v995 = vsel %vm937, %v700, 0.0
      %996 = vadd.xlane.f32.xlu0 %v995
      %v997 = vpop.xlane.xlu0 %996
      %v998 = vsel %vm937, %v701, 0.0
      %999 = vadd.xlane.f32.xlu0 %v998
      %v1000 = vpop.xlane.xlu0 %999
      %v1001 = vsel %vm937, %v702, 0.0
      %1002 = vadd.xlane.f32.xlu0 %v1001
      %v1003 = vpop.xlane.xlu0 %1002
      %v1004 = vsel %vm937, %v703, 0.0
      %1005 = vadd.xlane.f32.xlu0 %v1004
      %v1006 = vpop.xlane.xlu0 %1005
      %v1007 = vsel %vm937, %v704, 0.0
      %1008 = vadd.xlane.f32.xlu0 %v1007
      %v1009 = vpop.xlane.xlu0 %1008
      %v1010 = vsel %vm937, %v705, 0.0
      %1011 = vadd.xlane.f32.xlu0 %v1010
      %v1012 = vpop.xlane.xlu0 %1011
      %v1013 = vsel %vm937, %v706, 0.0
      %1014 = vadd.xlane.f32.xlu0 %v1013
      %v1015 = vpop.xlane.xlu0 %1014
      %v1016 = vsel %vm937, %v707, 0.0
      %1017 = vadd.xlane.f32.xlu0 %v1016
      %v1018 = vpop.xlane.xlu0 %1017
      %v1019 = vsel %vm937, %v708, 0.0
      %1020 = vadd.xlane.f32.xlu0 %v1019
      %v1021 = vpop.xlane.xlu0 %1020
      %v1022 = vsel %vm937, %v709, 0.0
      %1023 = vadd.xlane.f32.xlu0 %v1022
      %v1024 = vpop.xlane.xlu0 %1023
      %v1025 = vsel %vm937, %v710, 0.0
      %1026 = vadd.xlane.f32.xlu0 %v1025
      %v1027 = vpop.xlane.xlu0 %1026
      %v1028 = vsel %vm937, %v711, 0.0
      %1029 = vadd.xlane.f32.xlu0 %v1028
      %v1030 = vpop.xlane.xlu0 %1029
      %v1031 = vsel %vm937, %v712, 0.0
      %1032 = vadd.xlane.f32.xlu0 %v1031
      %v1033 = vpop.xlane.xlu0 %1032
      %v1034 = vsel %vm937, %v713, 0.0
      %1035 = vadd.xlane.f32.xlu0 %v1034
      %v1036 = vpop.xlane.xlu0 %1035
      %v1037 = vsel %vm937, %v714, 0.0
      %1038 = vadd.xlane.f32.xlu0 %v1037
      %v1039 = vpop.xlane.xlu0 %1038
      %v1040 = vsel %vm937, %v715, 0.0
      %1041 = vadd.xlane.f32.xlu0 %v1040
      %v1042 = vpop.xlane.xlu0 %1041
      %v1043 = vsel %vm937, %v716, 0.0
      %1044 = vadd.xlane.f32.xlu0 %v1043
      %v1045 = vpop.xlane.xlu0 %1044
      %v1046 = vsel %vm937, %v717, 0.0
      %1047 = vadd.xlane.f32.xlu0 %v1046
      %v1048 = vpop.xlane.xlu0 %1047
      %v1049 = vsel %vm937, %v718, 0.0
      %1050 = vadd.xlane.f32.xlu0 %v1049
      %v1051 = vpop.xlane.xlu0 %1050
      %v1052 = vsel %vm937, %v719, 0.0
      %1053 = vadd.xlane.f32.xlu0 %v1052
      %v1054 = vpop.xlane.xlu0 %1053
      %v1055 = vsel %vm937, %v720, 0.0
      %1056 = vadd.xlane.f32.xlu0 %v1055
      %v1057 = vpop.xlane.xlu0 %1056
      %v1058 = vsel %vm937, %v721, 0.0
      %1059 = vadd.xlane.f32.xlu0 %v1058
      %v1060 = vpop.xlane.xlu0 %1059
      %v1061 = vsel %vm937, %v722, 0.0
      %1062 = vadd.xlane.f32.xlu0 %v1061
      %v1063 = vpop.xlane.xlu0 %1062
      %v1064 = vsel %vm937, %v723, 0.0
      %1065 = vadd.xlane.f32.xlu0 %v1064
      %v1066 = vpop.xlane.xlu0 %1065
      %v1067 = vsel %vm937, %v724, 0.0
      %1068 = vadd.xlane.f32.xlu0 %v1067
      %v1069 = vpop.xlane.xlu0 %1068
      %v1070 = vsel %vm937, %v725, 0.0
      %1071 = vadd.xlane.f32.xlu0 %v1070
      %v1072 = vpop.xlane.xlu0 %1071
      %v1073 = vsel %vm937, %v726, 0.0
      %1074 = vadd.xlane.f32.xlu0 %v1073
      %v1075 = vpop.xlane.xlu0 %1074
      %v1076 = vsel %vm937, %v727, 0.0
      %1077 = vadd.xlane.f32.xlu0 %v1076
      %v1078 = vpop.xlane.xlu0 %1077
      %v1079 = vsel %vm937, %v728, 0.0
      %1080 = vadd.xlane.f32.xlu0 %v1079
      %v1081 = vpop.xlane.xlu0 %1080
      %v1082 = vsel %vm937, %v729, 0.0
      %1083 = vadd.xlane.f32.xlu0 %v1082
      %v1084 = vpop.xlane.xlu0 %1083
      %v1085 = vsel %vm937, %v730, 0.0
      %1086 = vadd.xlane.f32.xlu0 %v1085
      %v1087 = vpop.xlane.xlu0 %1086
      %v1088 = vsel %vm937, %v731, 0.0
      %1089 = vadd.xlane.f32.xlu0 %v1088
      %v1090 = vpop.xlane.xlu0 %1089
      %v1091 = vsel %vm937, %v732, 0.0
      %1092 = vadd.xlane.f32.xlu0 %v1091
      %v1093 = vpop.xlane.xlu0 %1092
      %v1094 = vsel %vm937, %v733, 0.0
      %1095 = vadd.xlane.f32.xlu0 %v1094
      %v1096 = vpop.xlane.xlu0 %1095
      %v1097 = vsel %vm937, %v734, 0.0
      %1098 = vadd.xlane.f32.xlu0 %v1097
      %v1099 = vpop.xlane.xlu0 %1098
      %v1100 = vsel %vm937, %v735, 0.0
      %1101 = vadd.xlane.f32.xlu0 %v1100
      %v1102 = vpop.xlane.xlu0 %1101
      %v1103 = vsel %vm937, %v736, 0.0
      %1104 = vadd.xlane.f32.xlu0 %v1103
      %v1105 = vpop.xlane.xlu0 %1104
      %v1106 = vsel %vm937, %v737, 0.0
      %1107 = vadd.xlane.f32.xlu0 %v1106
      %v1108 = vpop.xlane.xlu0 %1107
      %v1109 = vsel %vm937, %v738, 0.0
      %1110 = vadd.xlane.f32.xlu0 %v1109
      %v1111 = vpop.xlane.xlu0 %1110
      %v1112 = vsel %vm937, %v739, 0.0
      %1113 = vadd.xlane.f32.xlu0 %v1112
      %v1114 = vpop.xlane.xlu0 %1113
      %v1115 = vsel %vm937, %v740, 0.0
      %1116 = vadd.xlane.f32.xlu0 %v1115
      %v1117 = vpop.xlane.xlu0 %1116
      %v1118 = vsel %vm937, %v741, 0.0
      %1119 = vadd.xlane.f32.xlu0 %v1118
      %v1120 = vpop.xlane.xlu0 %1119
      %v1121 = vsel %vm937, %v742, 0.0
      %1122 = vadd.xlane.f32.xlu0 %v1121
      %v1123 = vpop.xlane.xlu0 %1122
      %v1124 = vsel %vm937, %v743, 0.0
      %1125 = vadd.xlane.f32.xlu0 %v1124
      %v1126 = vpop.xlane.xlu0 %1125
      %v1127 = vsel %vm937, %v744, 0.0
      %1128 = vadd.xlane.f32.xlu0 %v1127
      %v1129 = vpop.xlane.xlu0 %1128
      %v1130 = vsel %vm937, %v745, 0.0
      %1131 = vadd.xlane.f32.xlu0 %v1130
      %v1132 = vpop.xlane.xlu0 %1131
      %v1133 = vsel %vm937, %v746, 0.0
      %1134 = vadd.xlane.f32.xlu0 %v1133
      %v1135 = vpop.xlane.xlu0 %1134
      %v1136 = vsel %vm937, %v747, 0.0
      %1137 = vadd.xlane.f32.xlu0 %v1136
      %v1138 = vpop.xlane.xlu0 %1137
      %v1139 = vsel %vm937, %v748, 0.0
      %1140 = vadd.xlane.f32.xlu0 %v1139
      %v1141 = vpop.xlane.xlu0 %1140
      %v1142 = vsel %vm937, %v749, 0.0
      %1143 = vadd.xlane.f32.xlu0 %v1142
      %v1144 = vpop.xlane.xlu0 %1143
      %v1145 = vsel %vm937, %v750, 0.0
      %1146 = vadd.xlane.f32.xlu0 %v1145
      %v1147 = vpop.xlane.xlu0 %1146
      %v1148 = vsel %vm937, %v751, 0.0
      %1149 = vadd.xlane.f32.xlu0 %v1148
      %v1150 = vpop.xlane.xlu0 %1149
      %v1151 = vsel %vm937, %v752, 0.0
      %1152 = vadd.xlane.f32.xlu0 %v1151
      %v1153 = vpop.xlane.xlu0 %1152
      %v1154 = vsel %vm937, %v753, 0.0
      %1155 = vadd.xlane.f32.xlu0 %v1154
      %v1156 = vpop.xlane.xlu0 %1155
      %v1157 = vsel %vm937, %v754, 0.0
      %1158 = vadd.xlane.f32.xlu0 %v1157
      %v1159 = vpop.xlane.xlu0 %1158
      %v1160 = vsel %vm937, %v755, 0.0
      %1161 = vadd.xlane.f32.xlu0 %v1160
      %v1162 = vpop.xlane.xlu0 %1161
      %v1163 = vsel %vm937, %v756, 0.0
      %1164 = vadd.xlane.f32.xlu0 %v1163
      %v1165 = vpop.xlane.xlu0 %1164
      %v1166 = vsel %vm937, %v757, 0.0
      %1167 = vadd.xlane.f32.xlu0 %v1166
      %v1168 = vpop.xlane.xlu0 %1167
      %v1169 = vsel %vm937, %v758, 0.0
      %1170 = vadd.xlane.f32.xlu0 %v1169
      %v1171 = vpop.xlane.xlu0 %1170
      %v1172 = vsel %vm937, %v759, 0.0
      %1173 = vadd.xlane.f32.xlu0 %v1172
      %v1174 = vpop.xlane.xlu0 %1173
      %v1175 = vsel %vm937, %v760, 0.0
      %1176 = vadd.xlane.f32.xlu0 %v1175
      %v1177 = vpop.xlane.xlu0 %1176
      %v1178 = vsel %vm937, %v761, 0.0
      %1179 = vadd.xlane.f32.xlu0 %v1178
      %v1180 = vpop.xlane.xlu0 %1179
      %v1181 = vsel %vm937, %v762, 0.0
      %1182 = vadd.xlane.f32.xlu0 %v1181
      %v1183 = vpop.xlane.xlu0 %1182
      %v1184 = vsel %vm937, %v763, 0.0
      %1185 = vadd.xlane.f32.xlu0 %v1184
      %v1186 = vpop.xlane.xlu0 %1185
      %v1187 = vsel %vm937, %v764, 0.0
      %1188 = vadd.xlane.f32.xlu0 %v1187
      %v1189 = vpop.xlane.xlu0 %1188
      %v1190 = vsel %vm937, %v765, 0.0
      %1191 = vadd.xlane.f32.xlu0 %v1190
      %v1192 = vpop.xlane.xlu0 %1191
      %v1193 = vsel %vm937, %v766, 0.0
      %1194 = vadd.xlane.f32.xlu0 %v1193
      %v1195 = vpop.xlane.xlu0 %1194
      %v1196 = vsel %vm937, %v767, 0.0
      %1197 = vadd.xlane.f32.xlu0 %v1196
      %v1198 = vpop.xlane.xlu0 %1197
      %v1199 = vsel %vm937, %v768, 0.0
      %1200 = vadd.xlane.f32.xlu0 %v1199
      %v1201 = vpop.xlane.xlu0 %1200
      %v1202 = vsel %vm937, %v769, 0.0
      %1203 = vadd.xlane.f32.xlu0 %v1202
      %v1204 = vpop.xlane.xlu0 %1203
      %v1205 = vsel %vm937, %v770, 0.0
      %1206 = vadd.xlane.f32.xlu0 %v1205
      %v1207 = vpop.xlane.xlu0 %1206
      %v1208 = vsel %vm937, %v771, 0.0
      %1209 = vadd.xlane.f32.xlu0 %v1208
      %v1210 = vpop.xlane.xlu0 %1209
      %v1211 = vsel %vm937, %v772, 0.0
      %1212 = vadd.xlane.f32.xlu0 %v1211
      %v1213 = vpop.xlane.xlu0 %1212
      %v1214 = vsel %vm937, %v773, 0.0
      %1215 = vadd.xlane.f32.xlu0 %v1214
      %v1216 = vpop.xlane.xlu0 %1215
      %v1217 = vsel %vm937, %v774, 0.0
      %1218 = vadd.xlane.f32.xlu0 %v1217
      %v1219 = vpop.xlane.xlu0 %1218
      %v1220 = vsel %vm937, %v775, 0.0
      %1221 = vadd.xlane.f32.xlu0 %v1220
      %v1222 = vpop.xlane.xlu0 %1221
      %v1223 = vsel %vm937, %v776, 0.0
      %1224 = vadd.xlane.f32.xlu0 %v1223
      %v1225 = vpop.xlane.xlu0 %1224
      %v1226 = vsel %vm937, %v777, 0.0
      %1227 = vadd.xlane.f32.xlu0 %v1226
      %v1228 = vpop.xlane.xlu0 %1227
      %v1229 = vsel %vm937, %v778, 0.0
      %1230 = vadd.xlane.f32.xlu0 %v1229
      %v1231 = vpop.xlane.xlu0 %1230
      %v1232 = vsel %vm937, %v779, 0.0
      %1233 = vadd.xlane.f32.xlu0 %v1232
      %v1234 = vpop.xlane.xlu0 %1233
      %v1235 = vsel %vm937, %v780, 0.0
      %1236 = vadd.xlane.f32.xlu0 %v1235
      %v1237 = vpop.xlane.xlu0 %1236
      %v1238 = vsel %vm937, %v781, 0.0
      %1239 = vadd.xlane.f32.xlu0 %v1238
      %v1240 = vpop.xlane.xlu0 %1239
      %v1241 = vsel %vm937, %v782, 0.0
      %1242 = vadd.xlane.f32.xlu0 %v1241
      %v1243 = vpop.xlane.xlu0 %1242
      %v1244 = vsel %vm937, %v783, 0.0
      %1245 = vadd.xlane.f32.xlu0 %v1244
      %v1246 = vpop.xlane.xlu0 %1245
      %v1247 = vsel %vm937, %v784, 0.0
      %1248 = vadd.xlane.f32.xlu0 %v1247
      %v1249 = vpop.xlane.xlu0 %1248
      %v1250 = vsel %vm937, %v785, 0.0
      %1251 = vadd.xlane.f32.xlu0 %v1250
      %v1252 = vpop.xlane.xlu0 %1251
      %v1253 = vsel %vm937, %v786, 0.0
      %1254 = vadd.xlane.f32.xlu0 %v1253
      %v1255 = vpop.xlane.xlu0 %1254
      %v1256 = vsel %vm937, %v787, 0.0
      %1257 = vadd.xlane.f32.xlu0 %v1256
      %v1258 = vpop.xlane.xlu0 %1257
      %v1259 = vsel %vm937, %v788, 0.0
      %1260 = vadd.xlane.f32.xlu0 %v1259
      %v1261 = vpop.xlane.xlu0 %1260
      %v1262 = vsel %vm937, %v789, 0.0
      %1263 = vadd.xlane.f32.xlu0 %v1262
      %v1264 = vpop.xlane.xlu0 %1263
      %v1265 = vsel %vm937, %v790, 0.0
      %1266 = vadd.xlane.f32.xlu0 %v1265
      %v1267 = vpop.xlane.xlu0 %1266
      %v1268 = vsel %vm937, %v791, 0.0
      %1269 = vadd.xlane.f32.xlu0 %v1268
      %v1270 = vpop.xlane.xlu0 %1269
      %v1271 = vsel %vm937, %v792, 0.0
      %1272 = vadd.xlane.f32.xlu0 %v1271
      %v1273 = vpop.xlane.xlu0 %1272
      %v1274 = vsel %vm937, %v793, 0.0
      %1275 = vadd.xlane.f32.xlu0 %v1274
      %v1276 = vpop.xlane.xlu0 %1275
      %v1277 = vsel %vm937, %v794, 0.0
      %1278 = vadd.xlane.f32.xlu0 %v1277
      %v1279 = vpop.xlane.xlu0 %1278
      %v1280 = vsel %vm937, %v795, 0.0
      %1281 = vadd.xlane.f32.xlu0 %v1280
      %v1282 = vpop.xlane.xlu0 %1281
      %v1283 = vsel %vm937, %v796, 0.0
      %1284 = vadd.xlane.f32.xlu0 %v1283
      %v1285 = vpop.xlane.xlu0 %1284
      %v1286 = vsel %vm937, %v797, 0.0
      %1287 = vadd.xlane.f32.xlu0 %v1286
      %v1288 = vpop.xlane.xlu0 %1287
      %v1289 = vsel %vm937, %v798, 0.0
      %1290 = vadd.xlane.f32.xlu0 %v1289
      %v1291 = vpop.xlane.xlu0 %1290
      %v1292 = vsel %vm937, %v799, 0.0
      %1293 = vadd.xlane.f32.xlu0 %v1292
      %v1294 = vpop.xlane.xlu0 %1293
      %v1295 = vsel %vm937, %v800, 0.0
      %1296 = vadd.xlane.f32.xlu0 %v1295
      %v1297 = vpop.xlane.xlu0 %1296
      %v1298 = vsel %vm937, %v801, 0.0
      %1299 = vadd.xlane.f32.xlu0 %v1298
      %v1300 = vpop.xlane.xlu0 %1299
      %v1301 = vsel %vm937, %v802, 0.0
      %1302 = vadd.xlane.f32.xlu0 %v1301
      %v1303 = vpop.xlane.xlu0 %1302
      %v1304 = vsel %vm937, %v803, 0.0
      %1305 = vadd.xlane.f32.xlu0 %v1304
      %v1306 = vpop.xlane.xlu0 %1305
      %v1307 = vsel %vm937, %v804, 0.0
      %1308 = vadd.xlane.f32.xlu0 %v1307
      %v1309 = vpop.xlane.xlu0 %1308
      %v1310 = vsel %vm937, %v805, 0.0
      %1311 = vadd.xlane.f32.xlu0 %v1310
      %v1312 = vpop.xlane.xlu0 %1311
      %v1313 = vsel %vm937, %v806, 0.0
      %1314 = vadd.xlane.f32.xlu0 %v1313
      %v1315 = vpop.xlane.xlu0 %1314
      %v1316 = vsel %vm937, %v807, 0.0
      %1317 = vadd.xlane.f32.xlu0 %v1316
      %v1318 = vpop.xlane.xlu0 %1317
      %v1319 = vsel %vm937, %v808, 0.0
      %1320 = vadd.xlane.f32.xlu0 %v1319
      %v1321 = vpop.xlane.xlu0 %1320
      %v1322 = vsel %vm937, %v809, 0.0
      %1323 = vadd.xlane.f32.xlu0 %v1322
      %v1324 = vpop.xlane.xlu0 %1323
      %v1325 = vsel %vm937, %v810, 0.0
      %1326 = vadd.xlane.f32.xlu0 %v1325
      %v1327 = vpop.xlane.xlu0 %1326
      %v1328 = vsel %vm937, %v811, 0.0
      %1329 = vadd.xlane.f32.xlu0 %v1328
      %v1330 = vpop.xlane.xlu0 %1329
      %v1331 = vsel %vm937, %v812, 0.0
      %1332 = vadd.xlane.f32.xlu0 %v1331
      %v1333 = vpop.xlane.xlu0 %1332
      %v1334 = vsel %vm937, %v813, 0.0
      %1335 = vadd.xlane.f32.xlu0 %v1334
      %v1336 = vpop.xlane.xlu0 %1335
      %v1337 = vsel %vm937, %v814, 0.0
      %1338 = vadd.xlane.f32.xlu0 %v1337
      %v1339 = vpop.xlane.xlu0 %1338
      %v1340 = vsel %vm937, %v815, 0.0
      %1341 = vadd.xlane.f32.xlu0 %v1340
      %v1342 = vpop.xlane.xlu0 %1341
      %v1343 = vsel %vm937, %v816, 0.0
      %1344 = vadd.xlane.f32.xlu0 %v1343
      %v1345 = vpop.xlane.xlu0 %1344
      %v1346 = vsel %vm937, %v817, 0.0
      %1347 = vadd.xlane.f32.xlu0 %v1346
      %v1348 = vpop.xlane.xlu0 %1347
      %v1349 = vsel %vm937, %v818, 0.0
      %1350 = vadd.xlane.f32.xlu0 %v1349
      %v1351 = vpop.xlane.xlu0 %1350
      %v1352 = vsel %vm937, %v819, 0.0
      %1353 = vadd.xlane.f32.xlu0 %v1352
      %v1354 = vpop.xlane.xlu0 %1353
      %v1355 = vsel %vm937, %v820, 0.0
      %1356 = vadd.xlane.f32.xlu0 %v1355
      %v1357 = vpop.xlane.xlu0 %1356
      %v1358 = vsel %vm937, %v821, 0.0
      %1359 = vadd.xlane.f32.xlu0 %v1358
      %v1360 = vpop.xlane.xlu0 %1359
      %v1361 = vsel %vm937, %v822, 0.0
      %1362 = vadd.xlane.f32.xlu0 %v1361
      %v1363 = vpop.xlane.xlu0 %1362
      %v1364 = vsel %vm937, %v823, 0.0
      %1365 = vadd.xlane.f32.xlu0 %v1364
      %v1366 = vpop.xlane.xlu0 %1365
      %v1367 = vsel %vm937, %v824, 0.0
      %1368 = vadd.xlane.f32.xlu0 %v1367
      %v1369 = vpop.xlane.xlu0 %1368
      %v1370 = vsel %vm937, %v825, 0.0
      %1371 = vadd.xlane.f32.xlu0 %v1370
      %v1372 = vpop.xlane.xlu0 %1371
      %v1373 = vsel %vm937, %v826, 0.0
      %1374 = vadd.xlane.f32.xlu0 %v1373
      %v1375 = vpop.xlane.xlu0 %1374
      %v1376 = vsel %vm937, %v827, 0.0
      %1377 = vadd.xlane.f32.xlu0 %v1376
      %v1378 = vpop.xlane.xlu0 %1377
      %v1379 = vsel %vm937, %v828, 0.0
      %1380 = vadd.xlane.f32.xlu0 %v1379
      %v1381 = vpop.xlane.xlu0 %1380
      %v1382 = vsel %vm937, %v829, 0.0
      %1383 = vadd.xlane.f32.xlu0 %v1382
      %v1384 = vpop.xlane.xlu0 %1383
      %v1385 = vsel %vm937, %v830, 0.0
      %1386 = vadd.xlane.f32.xlu0 %v1385
      %v1387 = vpop.xlane.xlu0 %1386
      %v1388 = vsel %vm937, %v831, 0.0
      %1389 = vadd.xlane.f32.xlu0 %v1388
      %v1390 = vpop.xlane.xlu0 %1389
      %v1391 = vsel %vm937, %v832, 0.0
      %1392 = vadd.xlane.f32.xlu0 %v1391
      %v1393 = vpop.xlane.xlu0 %1392
      %v1394 = vsel %vm937, %v833, 0.0
      %1395 = vadd.xlane.f32.xlu0 %v1394
      %v1396 = vpop.xlane.xlu0 %1395
      %v1397 = vsel %vm937, %v834, 0.0
      %1398 = vadd.xlane.f32.xlu0 %v1397
      %v1399 = vpop.xlane.xlu0 %1398
      %v1400 = vsel %vm937, %v835, 0.0
      %1401 = vadd.xlane.f32.xlu0 %v1400
      %v1402 = vpop.xlane.xlu0 %1401
      %v1403 = vsel %vm937, %v836, 0.0
      %1404 = vadd.xlane.f32.xlu0 %v1403
      %v1405 = vpop.xlane.xlu0 %1404
      %v1406 = vsel %vm937, %v837, 0.0
      %1407 = vadd.xlane.f32.xlu0 %v1406
      %v1408 = vpop.xlane.xlu0 %1407
      %v1409 = vsel %vm937, %v838, 0.0
      %1410 = vadd.xlane.f32.xlu0 %v1409
      %v1411 = vpop.xlane.xlu0 %1410
      %v1412 = vsel %vm937, %v839, 0.0
      %1413 = vadd.xlane.f32.xlu0 %v1412
      %v1414 = vpop.xlane.xlu0 %1413
      %v1415 = vsel %vm937, %v840, 0.0
      %1416 = vadd.xlane.f32.xlu0 %v1415
      %v1417 = vpop.xlane.xlu0 %1416
      %v1418 = vsel %vm937, %v841, 0.0
      %1419 = vadd.xlane.f32.xlu0 %v1418
      %v1420 = vpop.xlane.xlu0 %1419
      %v1421 = vsel %vm937, %v842, 0.0
      %1422 = vadd.xlane.f32.xlu0 %v1421
      %v1423 = vpop.xlane.xlu0 %1422
      %v1424 = vsel %vm937, %v843, 0.0
      %1425 = vadd.xlane.f32.xlu0 %v1424
      %v1426 = vpop.xlane.xlu0 %1425
      %v1427 = vsel %vm937, %v844, 0.0
      %1428 = vadd.xlane.f32.xlu0 %v1427
      %v1429 = vpop.xlane.xlu0 %1428
      %v1430 = vsel %vm937, %v845, 0.0
      %1431 = vadd.xlane.f32.xlu0 %v1430
      %v1432 = vpop.xlane.xlu0 %1431
      %v1433 = vsel %vm937, %v846, 0.0
      %1434 = vadd.xlane.f32.xlu0 %v1433
      %v1435 = vpop.xlane.xlu0 %1434
      %v1436 = vsel %vm937, %v847, 0.0
      %1437 = vadd.xlane.f32.xlu0 %v1436
      %v1438 = vpop.xlane.xlu0 %1437
      %v1439 = vsel %vm937, %v848, 0.0
      %1440 = vadd.xlane.f32.xlu0 %v1439
      %v1441 = vpop.xlane.xlu0 %1440
      %v1442 = vsel %vm937, %v849, 0.0
      %1443 = vadd.xlane.f32.xlu0 %v1442
      %v1444 = vpop.xlane.xlu0 %1443
      %v1445 = vsel %vm937, %v850, 0.0
      %1446 = vadd.xlane.f32.xlu0 %v1445
      %v1447 = vpop.xlane.xlu0 %1446
      %v1448 = vsel %vm937, %v851, 0.0
      %1449 = vadd.xlane.f32.xlu0 %v1448
      %v1450 = vpop.xlane.xlu0 %1449
      %v1451 = vsel %vm937, %v852, 0.0
      %1452 = vadd.xlane.f32.xlu0 %v1451
      %v1453 = vpop.xlane.xlu0 %1452
      %v1454 = vsel %vm937, %v853, 0.0
      %1455 = vadd.xlane.f32.xlu0 %v1454
      %v1456 = vpop.xlane.xlu0 %1455
      %v1457 = vsel %vm937, %v854, 0.0
      %1458 = vadd.xlane.f32.xlu0 %v1457
      %v1459 = vpop.xlane.xlu0 %1458
      %v1460 = vsel %vm937, %v855, 0.0
      %1461 = vadd.xlane.f32.xlu0 %v1460
      %v1462 = vpop.xlane.xlu0 %1461
      %v1463 = vsel %vm937, %v856, 0.0
      %1464 = vadd.xlane.f32.xlu0 %v1463
      %v1465 = vpop.xlane.xlu0 %1464
      %v1466 = vsel %vm937, %v857, 0.0
      %1467 = vadd.xlane.f32.xlu0 %v1466
      %v1468 = vpop.xlane.xlu0 %1467
      %v1469 = vsel %vm937, %v858, 0.0
      %1470 = vadd.xlane.f32.xlu0 %v1469
      %v1471 = vpop.xlane.xlu0 %1470
      %v1472 = vsel %vm937, %v859, 0.0
      %1473 = vadd.xlane.f32.xlu0 %v1472
      %v1474 = vpop.xlane.xlu0 %1473
      %v1475 = vsel %vm937, %v860, 0.0
      %1476 = vadd.xlane.f32.xlu0 %v1475
      %v1477 = vpop.xlane.xlu0 %1476
      %v1478 = vsel %vm937, %v861, 0.0
      %1479 = vadd.xlane.f32.xlu0 %v1478
      %v1480 = vpop.xlane.xlu0 %1479
      %v1481 = vsel %vm937, %v862, 0.0
      %1482 = vadd.xlane.f32.xlu0 %v1481
      %v1483 = vpop.xlane.xlu0 %1482
      %v1484 = vsel %vm937, %v863, 0.0
      %1485 = vadd.xlane.f32.xlu0 %v1484
      %v1486 = vpop.xlane.xlu0 %1485
      %v1487 = vsel %vm937, %v864, 0.0
      %1488 = vadd.xlane.f32.xlu0 %v1487
      %v1489 = vpop.xlane.xlu0 %1488
      %v1490 = vsel %vm937, %v865, 0.0
      %1491 = vadd.xlane.f32.xlu0 %v1490
      %v1492 = vpop.xlane.xlu0 %1491
      %v1493 = vsel %vm937, %v866, 0.0
      %1494 = vadd.xlane.f32.xlu0 %v1493
      %v1495 = vpop.xlane.xlu0 %1494
      %v1496 = vsel %vm937, %v867, 0.0
      %1497 = vadd.xlane.f32.xlu0 %v1496
      %v1498 = vpop.xlane.xlu0 %1497
      %v1499 = vsel %vm937, %v868, 0.0
      %1500 = vadd.xlane.f32.xlu0 %v1499
      %v1501 = vpop.xlane.xlu0 %1500
      %v1502 = vsel %vm937, %v869, 0.0
      %1503 = vadd.xlane.f32.xlu0 %v1502
      %v1504 = vpop.xlane.xlu0 %1503
      %v1505 = vsel %vm937, %v870, 0.0
      %1506 = vadd.xlane.f32.xlu0 %v1505
      %v1507 = vpop.xlane.xlu0 %1506
      %v1508 = vsel %vm937, %v871, 0.0
      %1509 = vadd.xlane.f32.xlu0 %v1508
      %v1510 = vpop.xlane.xlu0 %1509
      %v1511 = vsel %vm937, %v872, 0.0
      %1512 = vadd.xlane.f32.xlu0 %v1511
      %v1513 = vpop.xlane.xlu0 %1512
      %v1514 = vsel %vm937, %v873, 0.0
      %1515 = vadd.xlane.f32.xlu0 %v1514
      %v1516 = vpop.xlane.xlu0 %1515
      %v1517 = vsel %vm937, %v874, 0.0
      %1518 = vadd.xlane.f32.xlu0 %v1517
      %v1519 = vpop.xlane.xlu0 %1518
      %v1520 = vsel %vm937, %v875, 0.0
      %1521 = vadd.xlane.f32.xlu0 %v1520
      %v1522 = vpop.xlane.xlu0 %1521
      %v1523 = vsel %vm937, %v876, 0.0
      %1524 = vadd.xlane.f32.xlu0 %v1523
      %v1525 = vpop.xlane.xlu0 %1524
      %v1526 = vsel %vm937, %v877, 0.0
      %1527 = vadd.xlane.f32.xlu0 %v1526
      %v1528 = vpop.xlane.xlu0 %1527
      %v1529 = vsel %vm937, %v878, 0.0
      %1530 = vadd.xlane.f32.xlu0 %v1529
      %v1531 = vpop.xlane.xlu0 %1530
      %v1532 = vsel %vm937, %v879, 0.0
      %1533 = vadd.xlane.f32.xlu0 %v1532
      %v1534 = vpop.xlane.xlu0 %1533
      %v1535 = vsel %vm937, %v880, 0.0
      %1536 = vadd.xlane.f32.xlu0 %v1535
      %v1537 = vpop.xlane.xlu0 %1536
      %v1538 = vsel %vm937, %v881, 0.0
      %1539 = vadd.xlane.f32.xlu0 %v1538
      %v1540 = vpop.xlane.xlu0 %1539
      %v1541 = vsel %vm937, %v882, 0.0
      %1542 = vadd.xlane.f32.xlu0 %v1541
      %v1543 = vpop.xlane.xlu0 %1542
      %v1544 = vsel %vm937, %v883, 0.0
      %1545 = vadd.xlane.f32.xlu0 %v1544
      %v1546 = vpop.xlane.xlu0 %1545
      %v1547 = vsel %vm937, %v884, 0.0
      %1548 = vadd.xlane.f32.xlu0 %v1547
      %v1549 = vpop.xlane.xlu0 %1548
      %v1550 = vsel %vm937, %v885, 0.0
      %1551 = vadd.xlane.f32.xlu0 %v1550
      %v1552 = vpop.xlane.xlu0 %1551
      %v1553 = vsel %vm937, %v886, 0.0
      %1554 = vadd.xlane.f32.xlu0 %v1553
      %v1555 = vpop.xlane.xlu0 %1554
      %v1556 = vsel %vm937, %v887, 0.0
      %1557 = vadd.xlane.f32.xlu0 %v1556
      %v1558 = vpop.xlane.xlu0 %1557
      %v1559 = vsel %vm937, %v888, 0.0
      %1560 = vadd.xlane.f32.xlu0 %v1559
      %v1561 = vpop.xlane.xlu0 %1560
      %v1562 = vsel %vm937, %v889, 0.0
      %1563 = vadd.xlane.f32.xlu0 %v1562
      %v1564 = vpop.xlane.xlu0 %1563
      %v1565 = vsel %vm937, %v890, 0.0
      %1566 = vadd.xlane.f32.xlu0 %v1565
      %v1567 = vpop.xlane.xlu0 %1566
      %v1568 = vsel %vm937, %v891, 0.0
      %1569 = vadd.xlane.f32.xlu0 %v1568
      %v1570 = vpop.xlane.xlu0 %1569
      %v1571 = vsel %vm937, %v892, 0.0
      %1572 = vadd.xlane.f32.xlu0 %v1571
      %v1573 = vpop.xlane.xlu0 %1572
      %v1574 = vsel %vm937, %v893, 0.0
      %1575 = vadd.xlane.f32.xlu0 %v1574
      %v1576 = vpop.xlane.xlu0 %1575
      %v1577 = vsel %vm937, %v894, 0.0
      %1578 = vadd.xlane.f32.xlu0 %v1577
      %v1579 = vpop.xlane.xlu0 %1578
      %v1580 = vsel %vm937, %v895, 0.0
      %1581 = vadd.xlane.f32.xlu0 %v1580
      %v1582 = vpop.xlane.xlu0 %1581
      %v1583 = vsel %vm937, %v896, 0.0
      %1584 = vadd.xlane.f32.xlu0 %v1583
      %v1585 = vpop.xlane.xlu0 %1584
      %v1586 = vsel %vm937, %v897, 0.0
      %1587 = vadd.xlane.f32.xlu0 %v1586
      %v1588 = vpop.xlane.xlu0 %1587
      %v1589 = vsel %vm937, %v898, 0.0
      %1590 = vadd.xlane.f32.xlu0 %v1589
      %v1591 = vpop.xlane.xlu0 %1590
      %v1592 = vsel %vm937, %v899, 0.0
      %1593 = vadd.xlane.f32.xlu0 %v1592
      %v1594 = vpop.xlane.xlu0 %1593
      %v1595 = vsel %vm937, %v900, 0.0
      %1596 = vadd.xlane.f32.xlu0 %v1595
      %v1597 = vpop.xlane.xlu0 %1596
      %v1598 = vsel %vm937, %v901, 0.0
      %1599 = vadd.xlane.f32.xlu0 %v1598
      %v1600 = vpop.xlane.xlu0 %1599
      %v1601 = vsel %vm937, %v902, 0.0
      %1602 = vadd.xlane.f32.xlu0 %v1601
      %v1603 = vpop.xlane.xlu0 %1602
      %v1604 = vsel %vm937, %v903, 0.0
      %1605 = vadd.xlane.f32.xlu0 %v1604
      %v1606 = vpop.xlane.xlu0 %1605
      %v1607 = vsel %vm937, %v904, 0.0
      %1608 = vadd.xlane.f32.xlu0 %v1607
      %v1609 = vpop.xlane.xlu0 %1608
      %v1610 = vsel %vm937, %v905, 0.0
      %1611 = vadd.xlane.f32.xlu0 %v1610
      %v1612 = vpop.xlane.xlu0 %1611
      %v1613 = vsel %vm937, %v906, 0.0
      %1614 = vadd.xlane.f32.xlu0 %v1613
      %v1615 = vpop.xlane.xlu0 %1614
      %v1616 = vsel %vm937, %v907, 0.0
      %1617 = vadd.xlane.f32.xlu0 %v1616
      %v1618 = vpop.xlane.xlu0 %1617
      %v1619 = vsel %vm937, %v908, 0.0
      %1620 = vadd.xlane.f32.xlu0 %v1619
      %v1621 = vpop.xlane.xlu0 %1620
      %v1622 = vsel %vm937, %v909, 0.0
      %1623 = vadd.xlane.f32.xlu0 %v1622
      %v1624 = vpop.xlane.xlu0 %1623
      %v1625 = vsel %vm937, %v910, 0.0
      %1626 = vadd.xlane.f32.xlu0 %v1625
      %v1627 = vpop.xlane.xlu0 %1626
      %v1628 = vsel %vm937, %v911, 0.0
      %1629 = vadd.xlane.f32.xlu0 %v1628
      %v1630 = vpop.xlane.xlu0 %1629
      %v1631 = vsel %vm937, %v912, 0.0
      %1632 = vadd.xlane.f32.xlu0 %v1631
      %v1633 = vpop.xlane.xlu0 %1632
      %v1634 = vsel %vm937, %v913, 0.0
      %1635 = vadd.xlane.f32.xlu0 %v1634
      %v1636 = vpop.xlane.xlu0 %1635
      %v1637 = vsel %vm937, %v914, 0.0
      %1638 = vadd.xlane.f32.xlu0 %v1637
      %v1639 = vpop.xlane.xlu0 %1638
      %v1640 = vsel %vm937, %v915, 0.0
      %1641 = vadd.xlane.f32.xlu0 %v1640
      %v1642 = vpop.xlane.xlu0 %1641
      %v1643 = vsel %vm937, %v916, 0.0
      %1644 = vadd.xlane.f32.xlu0 %v1643
      %v1645 = vpop.xlane.xlu0 %1644
      %v1646 = vsel %vm937, %v917, 0.0
      %1647 = vadd.xlane.f32.xlu0 %v1646
      %v1648 = vpop.xlane.xlu0 %1647
      %v1649 = vsel %vm937, %v918, 0.0
      %1650 = vadd.xlane.f32.xlu0 %v1649
      %v1651 = vpop.xlane.xlu0 %1650
      %v1652 = vsel %vm937, %v919, 0.0
      %1653 = vadd.xlane.f32.xlu0 %v1652
      %v1654 = vpop.xlane.xlu0 %1653
      %v1655 = vsel %vm937, %v920, 0.0
      %1656 = vadd.xlane.f32.xlu0 %v1655
      %v1657 = vpop.xlane.xlu0 %1656
      %v1658 = vsel %vm937, %v921, 0.0
      %1659 = vadd.xlane.f32.xlu0 %v1658
      %v1660 = vpop.xlane.xlu0 %1659
      %v1661 = vsel %vm937, %v922, 0.0
      %1662 = vadd.xlane.f32.xlu0 %v1661
      %v1663 = vpop.xlane.xlu0 %1662
      %v1664 = vsel %vm937, %v923, 0.0
      %1665 = vadd.xlane.f32.xlu0 %v1664
      %v1666 = vpop.xlane.xlu0 %1665
      %v1667 = vsel %vm937, %v924, 0.0
      %1668 = vadd.xlane.f32.xlu0 %v1667
      %v1669 = vpop.xlane.xlu0 %1668
      %v1670 = vsel %vm937, %v925, 0.0
      %1671 = vadd.xlane.f32.xlu0 %v1670
      %v1672 = vpop.xlane.xlu0 %1671
      %v1673 = vsel %vm937, %v926, 0.0
      %1674 = vadd.xlane.f32.xlu0 %v1673
      %v1675 = vpop.xlane.xlu0 %1674
      %v1676 = vsel %vm937, %v927, 0.0
      %1677 = vadd.xlane.f32.xlu0 %v1676
      %v1678 = vpop.xlane.xlu0 %1677
      %v1679 = vsel %vm937, %v928, 0.0
      %1680 = vadd.xlane.f32.xlu0 %v1679
      %v1681 = vpop.xlane.xlu0 %1680
      %v1682 = vsel %vm937, %v929, 0.0
      %1683 = vadd.xlane.f32.xlu0 %v1682
      %v1684 = vpop.xlane.xlu0 %1683
      %v1685 = vsel %vm937, %v930, 0.0
      %1686 = vadd.xlane.f32.xlu0 %v1685
      %v1687 = vpop.xlane.xlu0 %1686
      %v1688 = vsel %vm937, %v931, 0.0
      %1689 = vadd.xlane.f32.xlu0 %v1688
      %v1690 = vpop.xlane.xlu0 %1689
      %v1691 = vsel %vm937, %v932, 0.0
      %1692 = vadd.xlane.f32.xlu0 %v1691
      %v1693 = vpop.xlane.xlu0 %1692
      %v1694 = vsel %vm937, %v933, 0.0
      %1695 = vadd.xlane.f32.xlu0 %v1694
      %v1696 = vpop.xlane.xlu0 %1695
      %v1697 = vsel %vm937, %v934, 0.0
      %1698 = vadd.xlane.f32.xlu0 %v1697
      %v1699 = vpop.xlane.xlu0 %1698
      %v1700 = vsel %vm937, %v935, 0.0
      %1701 = vadd.xlane.f32.xlu0 %v1700
      %v1702 = vpop.xlane.xlu0 %1701
      %v1703 = vsel %vm937, %v936, 0.0
      %1704 = vadd.xlane.f32.xlu0 %v1703
      %v1705 = vpop.xlane.xlu0 %1704
      %vm1706 = vcmask 7168
      %1707 = vst.msk [vmem:[%s167] sm:$0xff] %vm1706, %v940
      %1708 = vst.msk [vmem:[%s167 + $0x8] sm:$0xff] %vm1706, %v943
      %1709 = vst.msk [vmem:[%s167 + $0x10] sm:$0xff] %vm1706, %v946
      %1710 = vst.msk [vmem:[%s167 + $0x18] sm:$0xff] %vm1706, %v949
      %1711 = vst.msk [vmem:[%s167 + $0x20] sm:$0xff] %vm1706, %v952
      %1712 = vst.msk [vmem:[%s167 + $0x28] sm:$0xff] %vm1706, %v955
      %1713 = vst.msk [vmem:[%s167 + $0x30] sm:$0xff] %vm1706, %v958
      %1714 = vst.msk [vmem:[%s167 + $0x38] sm:$0xff] %vm1706, %v961
      %1715 = vst.msk [vmem:[%s167 + $0x40] sm:$0xff] %vm1706, %v964
      %1716 = vst.msk [vmem:[%s167 + $0x48] sm:$0xff] %vm1706, %v967
      %1717 = vst.msk [vmem:[%s167 + $0x50] sm:$0xff] %vm1706, %v970
      %1718 = vst.msk [vmem:[%s167 + $0x58] sm:$0xff] %vm1706, %v973
      %1719 = vst.msk [vmem:[%s167 + $0x60] sm:$0xff] %vm1706, %v976
      %1720 = vst.msk [vmem:[%s167 + $0x68] sm:$0xff] %vm1706, %v979
      %1721 = vst.msk [vmem:[%s167 + $0x70] sm:$0xff] %vm1706, %v982
      %1722 = vst.msk [vmem:[%s167 + $0x78] sm:$0xff] %vm1706, %v985
      %1723 = vst.msk [vmem:[%s167 + $0x80] sm:$0xff] %vm1706, %v988
      %1724 = vst.msk [vmem:[%s167 + $0x88] sm:$0xff] %vm1706, %v991
      %1725 = vst.msk [vmem:[%s167 + $0x90] sm:$0xff] %vm1706, %v994
      %1726 = vst.msk [vmem:[%s167 + $0x98] sm:$0xff] %vm1706, %v997
      %1727 = vst.msk [vmem:[%s167 + $0xa0] sm:$0xff] %vm1706, %v1000
      %1728 = vst.msk [vmem:[%s167 + $0xa8] sm:$0xff] %vm1706, %v1003
      %1729 = vst.msk [vmem:[%s167 + $0xb0] sm:$0xff] %vm1706, %v1006
      %1730 = vst.msk [vmem:[%s167 + $0xb8] sm:$0xff] %vm1706, %v1009
      %1731 = vst.msk [vmem:[%s167 + $0xc0] sm:$0xff] %vm1706, %v1012
      %1732 = vst.msk [vmem:[%s167 + $0xc8] sm:$0xff] %vm1706, %v1015
      %1733 = vst.msk [vmem:[%s167 + $0xd0] sm:$0xff] %vm1706, %v1018
      %1734 = vst.msk [vmem:[%s167 + $0xd8] sm:$0xff] %vm1706, %v1021
      %1735 = vst.msk [vmem:[%s167 + $0xe0] sm:$0xff] %vm1706, %v1024
      %1736 = vst.msk [vmem:[%s167 + $0xe8] sm:$0xff] %vm1706, %v1027
      %1737 = vst.msk [vmem:[%s167 + $0xf0] sm:$0xff] %vm1706, %v1030
      %1738 = vst.msk [vmem:[%s167 + $0xf8] sm:$0xff] %vm1706, %v1033
      %1739 = vst.msk [vmem:[%s167 + $0x100] sm:$0xff] %vm1706, %v1036
      %1740 = vst.msk [vmem:[%s167 + $0x108] sm:$0xff] %vm1706, %v1039
      %1741 = vst.msk [vmem:[%s167 + $0x110] sm:$0xff] %vm1706, %v1042
      %1742 = vst.msk [vmem:[%s167 + $0x118] sm:$0xff] %vm1706, %v1045
      %1743 = vst.msk [vmem:[%s167 + $0x120] sm:$0xff] %vm1706, %v1048
      %1744 = vst.msk [vmem:[%s167 + $0x128] sm:$0xff] %vm1706, %v1051
      %1745 = vst.msk [vmem:[%s167 + $0x130] sm:$0xff] %vm1706, %v1054
      %1746 = vst.msk [vmem:[%s167 + $0x138] sm:$0xff] %vm1706, %v1057
      %1747 = vst.msk [vmem:[%s167 + $0x140] sm:$0xff] %vm1706, %v1060
      %1748 = vst.msk [vmem:[%s167 + $0x148] sm:$0xff] %vm1706, %v1063
      %1749 = vst.msk [vmem:[%s167 + $0x150] sm:$0xff] %vm1706, %v1066
      %1750 = vst.msk [vmem:[%s167 + $0x158] sm:$0xff] %vm1706, %v1069
      %1751 = vst.msk [vmem:[%s167 + $0x160] sm:$0xff] %vm1706, %v1072
      %1752 = vst.msk [vmem:[%s167 + $0x168] sm:$0xff] %vm1706, %v1075
      %1753 = vst.msk [vmem:[%s167 + $0x170] sm:$0xff] %vm1706, %v1078
      %1754 = vst.msk [vmem:[%s167 + $0x178] sm:$0xff] %vm1706, %v1081
      %1755 = vst.msk [vmem:[%s167 + $0x180] sm:$0xff] %vm1706, %v1084
      %1756 = vst.msk [vmem:[%s167 + $0x188] sm:$0xff] %vm1706, %v1087
      %1757 = vst.msk [vmem:[%s167 + $0x190] sm:$0xff] %vm1706, %v1090
      %1758 = vst.msk [vmem:[%s167 + $0x198] sm:$0xff] %vm1706, %v1093
      %1759 = vst.msk [vmem:[%s167 + $0x1a0] sm:$0xff] %vm1706, %v1096
      %1760 = vst.msk [vmem:[%s167 + $0x1a8] sm:$0xff] %vm1706, %v1099
      %1761 = vst.msk [vmem:[%s167 + $0x1b0] sm:$0xff] %vm1706, %v1102
      %1762 = vst.msk [vmem:[%s167 + $0x1b8] sm:$0xff] %vm1706, %v1105
      %1763 = vst.msk [vmem:[%s167 + $0x1c0] sm:$0xff] %vm1706, %v1108
      %1764 = vst.msk [vmem:[%s167 + $0x1c8] sm:$0xff] %vm1706, %v1111
      %1765 = vst.msk [vmem:[%s167 + $0x1d0] sm:$0xff] %vm1706, %v1114
      %1766 = vst.msk [vmem:[%s167 + $0x1d8] sm:$0xff] %vm1706, %v1117
      %1767 = vst.msk [vmem:[%s167 + $0x1e0] sm:$0xff] %vm1706, %v1120
      %1768 = vst.msk [vmem:[%s167 + $0x1e8] sm:$0xff] %vm1706, %v1123
      %1769 = vst.msk [vmem:[%s167 + $0x1f0] sm:$0xff] %vm1706, %v1126
      %1770 = vst.msk [vmem:[%s167 + $0x1f8] sm:$0xff] %vm1706, %v1129
      %1771 = vst.msk [vmem:[%s167 + $0x200] sm:$0xff] %vm1706, %v1132
      %1772 = vst.msk [vmem:[%s167 + $0x208] sm:$0xff] %vm1706, %v1135
      %1773 = vst.msk [vmem:[%s167 + $0x210] sm:$0xff] %vm1706, %v1138
      %1774 = vst.msk [vmem:[%s167 + $0x218] sm:$0xff] %vm1706, %v1141
      %1775 = vst.msk [vmem:[%s167 + $0x220] sm:$0xff] %vm1706, %v1144
      %1776 = vst.msk [vmem:[%s167 + $0x228] sm:$0xff] %vm1706, %v1147
      %1777 = vst.msk [vmem:[%s167 + $0x230] sm:$0xff] %vm1706, %v1150
      %1778 = vst.msk [vmem:[%s167 + $0x238] sm:$0xff] %vm1706, %v1153
      %1779 = vst.msk [vmem:[%s167 + $0x240] sm:$0xff] %vm1706, %v1156
      %1780 = vst.msk [vmem:[%s167 + $0x248] sm:$0xff] %vm1706, %v1159
      %1781 = vst.msk [vmem:[%s167 + $0x250] sm:$0xff] %vm1706, %v1162
      %1782 = vst.msk [vmem:[%s167 + $0x258] sm:$0xff] %vm1706, %v1165
      %1783 = vst.msk [vmem:[%s167 + $0x260] sm:$0xff] %vm1706, %v1168
      %1784 = vst.msk [vmem:[%s167 + $0x268] sm:$0xff] %vm1706, %v1171
      %1785 = vst.msk [vmem:[%s167 + $0x270] sm:$0xff] %vm1706, %v1174
      %1786 = vst.msk [vmem:[%s167 + $0x278] sm:$0xff] %vm1706, %v1177
      %1787 = vst.msk [vmem:[%s167 + $0x280] sm:$0xff] %vm1706, %v1180
      %1788 = vst.msk [vmem:[%s167 + $0x288] sm:$0xff] %vm1706, %v1183
      %1789 = vst.msk [vmem:[%s167 + $0x290] sm:$0xff] %vm1706, %v1186
      %1790 = vst.msk [vmem:[%s167 + $0x298] sm:$0xff] %vm1706, %v1189
      %1791 = vst.msk [vmem:[%s167 + $0x2a0] sm:$0xff] %vm1706, %v1192
      %1792 = vst.msk [vmem:[%s167 + $0x2a8] sm:$0xff] %vm1706, %v1195
      %1793 = vst.msk [vmem:[%s167 + $0x2b0] sm:$0xff] %vm1706, %v1198
      %1794 = vst.msk [vmem:[%s167 + $0x2b8] sm:$0xff] %vm1706, %v1201
      %1795 = vst.msk [vmem:[%s167 + $0x2c0] sm:$0xff] %vm1706, %v1204
      %1796 = vst.msk [vmem:[%s167 + $0x2c8] sm:$0xff] %vm1706, %v1207
      %1797 = vst.msk [vmem:[%s167 + $0x2d0] sm:$0xff] %vm1706, %v1210
      %1798 = vst.msk [vmem:[%s167 + $0x2d8] sm:$0xff] %vm1706, %v1213
      %1799 = vst.msk [vmem:[%s167 + $0x2e0] sm:$0xff] %vm1706, %v1216
      %1800 = vst.msk [vmem:[%s167 + $0x2e8] sm:$0xff] %vm1706, %v1219
      %1801 = vst.msk [vmem:[%s167 + $0x2f0] sm:$0xff] %vm1706, %v1222
      %1802 = vst.msk [vmem:[%s167 + $0x2f8] sm:$0xff] %vm1706, %v1225
      %1803 = vst.msk [vmem:[%s167 + $0x300] sm:$0xff] %vm1706, %v1228
      %1804 = vst.msk [vmem:[%s167 + $0x308] sm:$0xff] %vm1706, %v1231
      %1805 = vst.msk [vmem:[%s167 + $0x310] sm:$0xff] %vm1706, %v1234
      %1806 = vst.msk [vmem:[%s167 + $0x318] sm:$0xff] %vm1706, %v1237
      %1807 = vst.msk [vmem:[%s167 + $0x320] sm:$0xff] %vm1706, %v1240
      %1808 = vst.msk [vmem:[%s167 + $0x328] sm:$0xff] %vm1706, %v1243
      %1809 = vst.msk [vmem:[%s167 + $0x330] sm:$0xff] %vm1706, %v1246
      %1810 = vst.msk [vmem:[%s167 + $0x338] sm:$0xff] %vm1706, %v1249
      %1811 = vst.msk [vmem:[%s167 + $0x340] sm:$0xff] %vm1706, %v1252
      %1812 = vst.msk [vmem:[%s167 + $0x348] sm:$0xff] %vm1706, %v1255
      %1813 = vst.msk [vmem:[%s167 + $0x350] sm:$0xff] %vm1706, %v1258
      %1814 = vst.msk [vmem:[%s167 + $0x358] sm:$0xff] %vm1706, %v1261
      %1815 = vst.msk [vmem:[%s167 + $0x360] sm:$0xff] %vm1706, %v1264
      %1816 = vst.msk [vmem:[%s167 + $0x368] sm:$0xff] %vm1706, %v1267
      %1817 = vst.msk [vmem:[%s167 + $0x370] sm:$0xff] %vm1706, %v1270
      %1818 = vst.msk [vmem:[%s167 + $0x378] sm:$0xff] %vm1706, %v1273
      %1819 = vst.msk [vmem:[%s167 + $0x380] sm:$0xff] %vm1706, %v1276
      %1820 = vst.msk [vmem:[%s167 + $0x388] sm:$0xff] %vm1706, %v1279
      %1821 = vst.msk [vmem:[%s167 + $0x390] sm:$0xff] %vm1706, %v1282
      %1822 = vst.msk [vmem:[%s167 + $0x398] sm:$0xff] %vm1706, %v1285
      %1823 = vst.msk [vmem:[%s167 + $0x3a0] sm:$0xff] %vm1706, %v1288
      %1824 = vst.msk [vmem:[%s167 + $0x3a8] sm:$0xff] %vm1706, %v1291
      %1825 = vst.msk [vmem:[%s167 + $0x3b0] sm:$0xff] %vm1706, %v1294
      %1826 = vst.msk [vmem:[%s167 + $0x3b8] sm:$0xff] %vm1706, %v1297
      %1827 = vst.msk [vmem:[%s167 + $0x3c0] sm:$0xff] %vm1706, %v1300
      %1828 = vst.msk [vmem:[%s167 + $0x3c8] sm:$0xff] %vm1706, %v1303
      %1829 = vst.msk [vmem:[%s167 + $0x3d0] sm:$0xff] %vm1706, %v1306
      %1830 = vst.msk [vmem:[%s167 + $0x3d8] sm:$0xff] %vm1706, %v1309
      %1831 = vst.msk [vmem:[%s167 + $0x3e0] sm:$0xff] %vm1706, %v1312
      %1832 = vst.msk [vmem:[%s167 + $0x3e8] sm:$0xff] %vm1706, %v1315
      %1833 = vst.msk [vmem:[%s167 + $0x3f0] sm:$0xff] %vm1706, %v1318
      %1834 = vst.msk [vmem:[%s167 + $0x3f8] sm:$0xff] %vm1706, %v1321
      %1835 = vst.msk [vmem:[%s167 + $0x400] sm:$0xff] %vm1706, %v1324
      %1836 = vst.msk [vmem:[%s167 + $0x408] sm:$0xff] %vm1706, %v1327
      %1837 = vst.msk [vmem:[%s167 + $0x410] sm:$0xff] %vm1706, %v1330
      %1838 = vst.msk [vmem:[%s167 + $0x418] sm:$0xff] %vm1706, %v1333
      %1839 = vst.msk [vmem:[%s167 + $0x420] sm:$0xff] %vm1706, %v1336
      %1840 = vst.msk [vmem:[%s167 + $0x428] sm:$0xff] %vm1706, %v1339
      %1841 = vst.msk [vmem:[%s167 + $0x430] sm:$0xff] %vm1706, %v1342
      %1842 = vst.msk [vmem:[%s167 + $0x438] sm:$0xff] %vm1706, %v1345
      %1843 = vst.msk [vmem:[%s167 + $0x440] sm:$0xff] %vm1706, %v1348
      %1844 = vst.msk [vmem:[%s167 + $0x448] sm:$0xff] %vm1706, %v1351
      %1845 = vst.msk [vmem:[%s167 + $0x450] sm:$0xff] %vm1706, %v1354
      %1846 = vst.msk [vmem:[%s167 + $0x458] sm:$0xff] %vm1706, %v1357
      %1847 = vst.msk [vmem:[%s167 + $0x460] sm:$0xff] %vm1706, %v1360
      %1848 = vst.msk [vmem:[%s167 + $0x468] sm:$0xff] %vm1706, %v1363
      %1849 = vst.msk [vmem:[%s167 + $0x470] sm:$0xff] %vm1706, %v1366
      %1850 = vst.msk [vmem:[%s167 + $0x478] sm:$0xff] %vm1706, %v1369
      %1851 = vst.msk [vmem:[%s167 + $0x480] sm:$0xff] %vm1706, %v1372
      %1852 = vst.msk [vmem:[%s167 + $0x488] sm:$0xff] %vm1706, %v1375
      %1853 = vst.msk [vmem:[%s167 + $0x490] sm:$0xff] %vm1706, %v1378
      %1854 = vst.msk [vmem:[%s167 + $0x498] sm:$0xff] %vm1706, %v1381
      %1855 = vst.msk [vmem:[%s167 + $0x4a0] sm:$0xff] %vm1706, %v1384
      %1856 = vst.msk [vmem:[%s167 + $0x4a8] sm:$0xff] %vm1706, %v1387
      %1857 = vst.msk [vmem:[%s167 + $0x4b0] sm:$0xff] %vm1706, %v1390
      %1858 = vst.msk [vmem:[%s167 + $0x4b8] sm:$0xff] %vm1706, %v1393
      %1859 = vst.msk [vmem:[%s167 + $0x4c0] sm:$0xff] %vm1706, %v1396
      %1860 = vst.msk [vmem:[%s167 + $0x4c8] sm:$0xff] %vm1706, %v1399
      %1861 = vst.msk [vmem:[%s167 + $0x4d0] sm:$0xff] %vm1706, %v1402
      %1862 = vst.msk [vmem:[%s167 + $0x4d8] sm:$0xff] %vm1706, %v1405
      %1863 = vst.msk [vmem:[%s167 + $0x4e0] sm:$0xff] %vm1706, %v1408
      %1864 = vst.msk [vmem:[%s167 + $0x4e8] sm:$0xff] %vm1706, %v1411
      %1865 = vst.msk [vmem:[%s167 + $0x4f0] sm:$0xff] %vm1706, %v1414
      %1866 = vst.msk [vmem:[%s167 + $0x4f8] sm:$0xff] %vm1706, %v1417
      %1867 = vst.msk [vmem:[%s167 + $0x500] sm:$0xff] %vm1706, %v1420
      %1868 = vst.msk [vmem:[%s167 + $0x508] sm:$0xff] %vm1706, %v1423
      %1869 = vst.msk [vmem:[%s167 + $0x510] sm:$0xff] %vm1706, %v1426
      %1870 = vst.msk [vmem:[%s167 + $0x518] sm:$0xff] %vm1706, %v1429
      %1871 = vst.msk [vmem:[%s167 + $0x520] sm:$0xff] %vm1706, %v1432
      %1872 = vst.msk [vmem:[%s167 + $0x528] sm:$0xff] %vm1706, %v1435
      %1873 = vst.msk [vmem:[%s167 + $0x530] sm:$0xff] %vm1706, %v1438
      %1874 = vst.msk [vmem:[%s167 + $0x538] sm:$0xff] %vm1706, %v1441
      %1875 = vst.msk [vmem:[%s167 + $0x540] sm:$0xff] %vm1706, %v1444
      %1876 = vst.msk [vmem:[%s167 + $0x548] sm:$0xff] %vm1706, %v1447
      %1877 = vst.msk [vmem:[%s167 + $0x550] sm:$0xff] %vm1706, %v1450
      %1878 = vst.msk [vmem:[%s167 + $0x558] sm:$0xff] %vm1706, %v1453
      %1879 = vst.msk [vmem:[%s167 + $0x560] sm:$0xff] %vm1706, %v1456
      %1880 = vst.msk [vmem:[%s167 + $0x568] sm:$0xff] %vm1706, %v1459
      %1881 = vst.msk [vmem:[%s167 + $0x570] sm:$0xff] %vm1706, %v1462
      %1882 = vst.msk [vmem:[%s167 + $0x578] sm:$0xff] %vm1706, %v1465
      %1883 = vst.msk [vmem:[%s167 + $0x580] sm:$0xff] %vm1706, %v1468
      %1884 = vst.msk [vmem:[%s167 + $0x588] sm:$0xff] %vm1706, %v1471
      %1885 = vst.msk [vmem:[%s167 + $0x590] sm:$0xff] %vm1706, %v1474
      %1886 = vst.msk [vmem:[%s167 + $0x598] sm:$0xff] %vm1706, %v1477
      %1887 = vst.msk [vmem:[%s167 + $0x5a0] sm:$0xff] %vm1706, %v1480
      %1888 = vst.msk [vmem:[%s167 + $0x5a8] sm:$0xff] %vm1706, %v1483
      %1889 = vst.msk [vmem:[%s167 + $0x5b0] sm:$0xff] %vm1706, %v1486
      %1890 = vst.msk [vmem:[%s167 + $0x5b8] sm:$0xff] %vm1706, %v1489
      %1891 = vst.msk [vmem:[%s167 + $0x5c0] sm:$0xff] %vm1706, %v1492
      %1892 = vst.msk [vmem:[%s167 + $0x5c8] sm:$0xff] %vm1706, %v1495
      %1893 = vst.msk [vmem:[%s167 + $0x5d0] sm:$0xff] %vm1706, %v1498
      %1894 = vst.msk [vmem:[%s167 + $0x5d8] sm:$0xff] %vm1706, %v1501
      %1895 = vst.msk [vmem:[%s167 + $0x5e0] sm:$0xff] %vm1706, %v1504
      %1896 = vst.msk [vmem:[%s167 + $0x5e8] sm:$0xff] %vm1706, %v1507
      %1897 = vst.msk [vmem:[%s167 + $0x5f0] sm:$0xff] %vm1706, %v1510
      %1898 = vst.msk [vmem:[%s167 + $0x5f8] sm:$0xff] %vm1706, %v1513
      %1899 = vst.msk [vmem:[%s167 + $0x600] sm:$0xff] %vm1706, %v1516
      %1900 = vst.msk [vmem:[%s167 + $0x608] sm:$0xff] %vm1706, %v1519
      %1901 = vst.msk [vmem:[%s167 + $0x610] sm:$0xff] %vm1706, %v1522
      %1902 = vst.msk [vmem:[%s167 + $0x618] sm:$0xff] %vm1706, %v1525
      %1903 = vst.msk [vmem:[%s167 + $0x620] sm:$0xff] %vm1706, %v1528
      %1904 = vst.msk [vmem:[%s167 + $0x628] sm:$0xff] %vm1706, %v1531
      %1905 = vst.msk [vmem:[%s167 + $0x630] sm:$0xff] %vm1706, %v1534
      %1906 = vst.msk [vmem:[%s167 + $0x638] sm:$0xff] %vm1706, %v1537
      %1907 = vst.msk [vmem:[%s167 + $0x640] sm:$0xff] %vm1706, %v1540
      %1908 = vst.msk [vmem:[%s167 + $0x648] sm:$0xff] %vm1706, %v1543
      %1909 = vst.msk [vmem:[%s167 + $0x650] sm:$0xff] %vm1706, %v1546
      %1910 = vst.msk [vmem:[%s167 + $0x658] sm:$0xff] %vm1706, %v1549
      %1911 = vst.msk [vmem:[%s167 + $0x660] sm:$0xff] %vm1706, %v1552
      %1912 = vst.msk [vmem:[%s167 + $0x668] sm:$0xff] %vm1706, %v1555
      %1913 = vst.msk [vmem:[%s167 + $0x670] sm:$0xff] %vm1706, %v1558
      %1914 = vst.msk [vmem:[%s167 + $0x678] sm:$0xff] %vm1706, %v1561
      %1915 = vst.msk [vmem:[%s167 + $0x680] sm:$0xff] %vm1706, %v1564
      %1916 = vst.msk [vmem:[%s167 + $0x688] sm:$0xff] %vm1706, %v1567
      %1917 = vst.msk [vmem:[%s167 + $0x690] sm:$0xff] %vm1706, %v1570
      %1918 = vst.msk [vmem:[%s167 + $0x698] sm:$0xff] %vm1706, %v1573
      %1919 = vst.msk [vmem:[%s167 + $0x6a0] sm:$0xff] %vm1706, %v1576
      %1920 = vst.msk [vmem:[%s167 + $0x6a8] sm:$0xff] %vm1706, %v1579
      %1921 = vst.msk [vmem:[%s167 + $0x6b0] sm:$0xff] %vm1706, %v1582
      %1922 = vst.msk [vmem:[%s167 + $0x6b8] sm:$0xff] %vm1706, %v1585
      %1923 = vst.msk [vmem:[%s167 + $0x6c0] sm:$0xff] %vm1706, %v1588
      %1924 = vst.msk [vmem:[%s167 + $0x6c8] sm:$0xff] %vm1706, %v1591
      %1925 = vst.msk [vmem:[%s167 + $0x6d0] sm:$0xff] %vm1706, %v1594
      %1926 = vst.msk [vmem:[%s167 + $0x6d8] sm:$0xff] %vm1706, %v1597
      %1927 = vst.msk [vmem:[%s167 + $0x6e0] sm:$0xff] %vm1706, %v1600
      %1928 = vst.msk [vmem:[%s167 + $0x6e8] sm:$0xff] %vm1706, %v1603
      %1929 = vst.msk [vmem:[%s167 + $0x6f0] sm:$0xff] %vm1706, %v1606
      %1930 = vst.msk [vmem:[%s167 + $0x6f8] sm:$0xff] %vm1706, %v1609
      %1931 = vst.msk [vmem:[%s167 + $0x700] sm:$0xff] %vm1706, %v1612
      %1932 = vst.msk [vmem:[%s167 + $0x708] sm:$0xff] %vm1706, %v1615
      %1933 = vst.msk [vmem:[%s167 + $0x710] sm:$0xff] %vm1706, %v1618
      %1934 = vst.msk [vmem:[%s167 + $0x718] sm:$0xff] %vm1706, %v1621
      %1935 = vst.msk [vmem:[%s167 + $0x720] sm:$0xff] %vm1706, %v1624
      %1936 = vst.msk [vmem:[%s167 + $0x728] sm:$0xff] %vm1706, %v1627
      %1937 = vst.msk [vmem:[%s167 + $0x730] sm:$0xff] %vm1706, %v1630
      %1938 = vst.msk [vmem:[%s167 + $0x738] sm:$0xff] %vm1706, %v1633
      %1939 = vst.msk [vmem:[%s167 + $0x740] sm:$0xff] %vm1706, %v1636
      %1940 = vst.msk [vmem:[%s167 + $0x748] sm:$0xff] %vm1706, %v1639
      %1941 = vst.msk [vmem:[%s167 + $0x750] sm:$0xff] %vm1706, %v1642
      %1942 = vst.msk [vmem:[%s167 + $0x758] sm:$0xff] %vm1706, %v1645
      %1943 = vst.msk [vmem:[%s167 + $0x760] sm:$0xff] %vm1706, %v1648
      %1944 = vst.msk [vmem:[%s167 + $0x768] sm:$0xff] %vm1706, %v1651
      %1945 = vst.msk [vmem:[%s167 + $0x770] sm:$0xff] %vm1706, %v1654
      %1946 = vst.msk [vmem:[%s167 + $0x778] sm:$0xff] %vm1706, %v1657
      %1947 = vst.msk [vmem:[%s167 + $0x780] sm:$0xff] %vm1706, %v1660
      %1948 = vst.msk [vmem:[%s167 + $0x788] sm:$0xff] %vm1706, %v1663
      %1949 = vst.msk [vmem:[%s167 + $0x790] sm:$0xff] %vm1706, %v1666
      %1950 = vst.msk [vmem:[%s167 + $0x798] sm:$0xff] %vm1706, %v1669
      %1951 = vst.msk [vmem:[%s167 + $0x7a0] sm:$0xff] %vm1706, %v1672
      %1952 = vst.msk [vmem:[%s167 + $0x7a8] sm:$0xff] %vm1706, %v1675
      %1953 = vst.msk [vmem:[%s167 + $0x7b0] sm:$0xff] %vm1706, %v1678
      %1954 = vst.msk [vmem:[%s167 + $0x7b8] sm:$0xff] %vm1706, %v1681
      %1955 = vst.msk [vmem:[%s167 + $0x7c0] sm:$0xff] %vm1706, %v1684
      %1956 = vst.msk [vmem:[%s167 + $0x7c8] sm:$0xff] %vm1706, %v1687
      %1957 = vst.msk [vmem:[%s167 + $0x7d0] sm:$0xff] %vm1706, %v1690
      %1958 = vst.msk [vmem:[%s167 + $0x7d8] sm:$0xff] %vm1706, %v1693
      %1959 = vst.msk [vmem:[%s167 + $0x7e0] sm:$0xff] %vm1706, %v1696
      %1960 = vst.msk [vmem:[%s167 + $0x7e8] sm:$0xff] %vm1706, %v1699
      %1961 = vst.msk [vmem:[%s167 + $0x7f0] sm:$0xff] %vm1706, %v1702
      %1962 = vst.msk [vmem:[%s167 + $0x7f8] sm:$0xff] %vm1706, %v1705
      %s1963 = smul.u32 256, %s13
      %p1964 = scmp.lt.s32.totalorder %s1963, 511
      %s1965 = scalar_select %p1964, %s1963, 511
      %s1966 = smul.addr %s1965, 8
      %s1967 = scalar_lea.vmem %s2, %s1966
      // Predicated region
      $region29: #{tpu_custom_call.1} parent=27 // pred_check
        %p1968 = pneg %p83
      $region30: #{tpu_custom_call.1} parent=27 // pred_check_branch
        %1970 = sbr.rel (%p1968) target = $region32
      $region31: #{tpu_custom_call.1} parent=27 // pred_region
        %s1971 = smul.u32 256, %s13
      $region32: #{tpu_custom_call.1} parent=27 // pred_fallthru
        _
    $region28: #{tpu_custom_call.1} parent=5 // pred_fallthru
      _
    %p1972 = scmp.le.s32.totalorder 2, %s8
    // Predicated region
    $region33: #{tpu_custom_call.1} parent=5 // pred_check
      %p1973 = pneg %p1972
    $region34: #{tpu_custom_call.1} parent=5 // pred_check_branch
      %1975 = sbr.rel (%p1973) target = $region36
    $region35: #{tpu_custom_call.1} parent=5 // pred_region
      %s1976 = ssub.s32 %s8, 2
      // Predicated region
      $region37: #{tpu_custom_call.1} parent=35 // pred_check
        %p1977 = pneg %p89
      $region38: #{tpu_custom_call.1} parent=35 // pred_check_branch
        %1979 = sbr.rel (%p1977) target = $region40
      $region39: #{tpu_custom_call.1} parent=35 // pred_region
        %s1980 = smul.u32 256, %s14
        %p1981 = scmp.lt.s32.totalorder %s1980, 511
        %s1982 = scalar_select %p1981, %s1980, 511
        %s1983 = smul.addr %s1982, 8
        %s1984 = scalar_lea.vmem %s2, %s1983
      $region40: #{tpu_custom_call.1} parent=35 // pred_fallthru
        _
    $region36: #{tpu_custom_call.1} parent=5 // pred_fallthru
      _
  $region6: #{tpu_custom_call.1} parent=0 // loop_footer
    %s12 = sadd.s32 1, %s8
  $region7: #{tpu_custom_call.1} parent=0 // loop_footer_branch
    %7 = sbr.rel target = $region3
  $region8: #{tpu_custom_call.1} parent=0 // loop_exit
    _

</llo_original>
